<compile_context>
chip_gen: v7x
topology: tpu7x:2x2x1
jax: 0.10.0
libtpu: 0.0.40
codegen_flags: <defaults>
</compile_context>

<pallas_src>
import jax
import jax.numpy as jnp
from jax.experimental import pallas as pl
from jax.experimental.pallas import tpu as pltpu

# ----------------------------------------------------------------------------
# Synthetic model configuration (shapes consistent with Model.__init__)
# ----------------------------------------------------------------------------
MO_NAMES = ["mut", "expr"]          # multi-omics views
GENES_DIM = [16, 16]                # genes per omics view
CCL_HIDDENS = 8                     # hidden size of every VNN term
DRUG_HIDDENS = [16, 8]              # drug MLP hidden sizes
DRUGS_DIM = [12, 12]                # drug feature blocks (concatenated)
FINAL_HIDDENS = 8                   # final head hidden size
BATCH = 8                           # multiple of 8 -> full f32 sublanes

# Small GO-like hierarchy: root -> {A, B}; leaves processed first (topological).
MO_GENE2TERM = [
    {"GO_A": [0, 1, 2], "GO_B": [3, 4], "GO_root": [5, 6, 7, 8]},   # view "mut"
    {"GO_A": [1, 2], "GO_root": [0, 3]},                            # view "expr"
]
TERM_CHILDREN = {"GO_root": ["GO_A", "GO_B"], "GO_A": [], "GO_B": []}
VNN_LAYERS = [["GO_A", "GO_B"], ["GO_root"]]
TERM2ID = {"GO_A": 0, "GO_B": 1, "GO_root": 2}
N_TERMS = len(TERM2ID)

BN_EPS = 1e-5


# ----------------------------------------------------------------------------
# Static plans (shared by param construction and the kernel body)
# ----------------------------------------------------------------------------
def _build_term_piece_plan():
    """Per VNN term: ordered list of (kind, key, width) describing the pieces
    that the PyTorch code concatenates before the term's Linear layer."""
    plan = {}
    for layer in VNN_LAYERS:
        for term in layer:
            pieces = []
            for child in TERM_CHILDREN[term]:
                pieces.append(("child", child, CCL_HIDDENS))
            for idx, mo_name in enumerate(MO_NAMES):
                if term in MO_GENE2TERM[idx]:
                    pieces.append(("gene", mo_name, len(MO_GENE2TERM[idx][term])))
            for t in [term] + TERM_CHILDREN[term]:
                pieces.append(("path", TERM2ID[t], 1))
            plan[term] = pieces
    return plan


def _build_gene_term_offsets():
    """Per omics view: term -> (column offset, width) in the batched gene matmul."""
    offsets = []
    for idx in range(len(MO_NAMES)):
        view, off = {}, 0
        for term, gene_set in MO_GENE2TERM[idx].items():
            view[term] = (off, len(gene_set))
            off += len(gene_set)
        offsets.append(view)
    return offsets


TERM_PIECE_PLAN = _build_term_piece_plan()
GENE_TERM_OFFSETS = _build_gene_term_offsets()


# ----------------------------------------------------------------------------
# Deterministic parameter construction (pre-transposed / pre-split / pre-reshaped)
# ----------------------------------------------------------------------------
def _init_linear(key, out_dim, in_dim):
    kw, kb = jax.random.split(key)
    bound = 1.0 / (in_dim ** 0.5)
    w = jax.random.uniform(kw, (out_dim, in_dim), jnp.float32, -bound, bound)
    b = jax.random.uniform(kb, (out_dim,), jnp.float32, -bound, bound)
    return w, b


def build_params(seed=42):
    key = jax.random.PRNGKey(seed)
    params = {}

    def next_key():
        nonlocal key
        key, sub = jax.random.split(key)
        return sub

    # Gene layers batched per omics view: one (genes_dim, sum_out) W^T + bias row.
    for idx, mo_name in enumerate(MO_NAMES):
        wts, bs = [], []
        for term, gene_set in MO_GENE2TERM[idx].items():
            w, b = _init_linear(next_key(), len(gene_set), GENES_DIM[idx])
            wts.append(w.T)
            bs.append(b)
        params[f"gene_layer_{mo_name}"] = (
            jnp.concatenate(wts, axis=1),
            jnp.concatenate(bs).reshape(1, -1),
        )

    # VNN graph layers: Linear(input_size, ccl_hiddens) with W^T split per piece,
    # plus BatchNorm1d affine params as (1, C) rows.
    for layer in VNN_LAYERS:
        for term in layer:
            plan = TERM_PIECE_PLAN[term]
            input_size = sum(width for _, _, width in plan)
            w, b = _init_linear(next_key(), CCL_HIDDENS, input_size)
            wt = w.T                                    # (input_size, ccl_hiddens)
            chunks, off = [], 0
            for _, _, width in plan:
                chunks.append(wt[off:off + width, :])
                off += width
            params[f"{term}_linear_layer"] = (tuple(chunks), b.reshape(1, -1))
            params[f"{term}_batchnorm_layer"] = (
                jnp.ones((1, CCL_HIDDENS), jnp.float32),
                jnp.zeros((1, CCL_HIDDENS), jnp.float32),
            )

    # Drug MLP
    in_dim = sum(DRUGS_DIM)
    for i, h in enumerate(DRUG_HIDDENS, start=1):
        w, b = _init_linear(next_key(), h, in_dim)
        params[f"drug_linear_layer_{i}"] = (w.T, b.reshape(1, -1))
        params[f"drug_batchnorm_layer_{i}"] = (
            jnp.ones((1, h), jnp.float32), jnp.zeros((1, h), jnp.float32))
        in_dim = h

    # Final head: layer 1's W^T split into [ccl | drug] chunks (removes the concat).
    final_in = CCL_HIDDENS + DRUG_HIDDENS[-1]
    w, b = _init_linear(next_key(), FINAL_HIDDENS, final_in)
    wt = w.T
    params["final_linear_layer_1"] = (
        wt[:CCL_HIDDENS, :], wt[CCL_HIDDENS:, :], b.reshape(1, -1))
    params["final_batchnorm_layer_1"] = (
        jnp.ones((1, FINAL_HIDDENS), jnp.float32),
        jnp.zeros((1, FINAL_HIDDENS), jnp.float32))
    w2, b2 = _init_linear(next_key(), 1, FINAL_HIDDENS)
    params["final_linear_layer_2"] = (w2.T, b2.reshape(1, -1))
    return params


# ----------------------------------------------------------------------------
# Shared forward math (traced inside the kernel; also used for a JAX reference)
# ----------------------------------------------------------------------------
def _model_math(p, mo_inputs, drugs, path_act, dot):
    def batchnorm(h, gamma, beta):
        # Training-mode BatchNorm1d: biased batch statistics.
        mean = jnp.mean(h, axis=0, keepdims=True)
        var = jnp.mean((h - mean) ** 2, axis=0, keepdims=True)
        return (h - mean) * jax.lax.rsqrt(var + BN_EPS) * gamma + beta

    # --- gene layers: one matmul per omics view, static column slices per term ---
    term_gene_out = {mo: {} for mo in MO_NAMES}
    for idx, mo_name in enumerate(MO_NAMES):
        wt, b = p[f"gene_layer_{mo_name}"]
        g = dot(mo_inputs[idx], wt) + b
        for term, (off, width) in GENE_TERM_OFFSETS[idx].items():
            term_gene_out[mo_name][term] = g[:, off:off + width]

    # --- VNN hierarchy: concat replaced by partial dots over weight chunks ---
    term_vnn_out = {}
    last = None
    for layer in VNN_LAYERS:
        for term in layer:
            chunks, b = p[f"{term}_linear_layer"]
            gamma, beta = p[f"{term}_batchnorm_layer"]
            acc = None
            for (kind, key, _), wt_chunk in zip(TERM_PIECE_PLAN[term], chunks):
                if kind == "child":
                    contrib = dot(term_vnn_out[key], wt_chunk)
                elif kind == "gene":
                    contrib = dot(term_gene_out[key][term], wt_chunk)
                else:  # "path": rank-1 update from one path-activity column
                    contrib = path_act[:, key:key + 1] * wt_chunk
                acc = contrib if acc is None else acc + contrib
            h = jnp.tanh(acc + b)
            last = batchnorm(h, gamma, beta)
            term_vnn_out[term] = last
    ccl_out = last  # root term output

    # --- drug MLP ---
    drug_out = drugs
    for i in range(1, len(DRUG_HIDDENS) + 1):
        wt, b = p[f"drug_linear_layer_{i}"]
        gamma, beta = p[f"drug_batchnorm_layer_{i}"]
        drug_out = batchnorm(jnp.tanh(dot(drug_out, wt) + b), gamma, beta)

    # --- final head (concat replaced by two partial dots) ---
    wt_ccl, wt_drug, b1 = p["final_linear_layer_1"]
    gamma1, beta1 = p["final_batchnorm_layer_1"]
    h = jnp.tanh(dot(ccl_out, wt_ccl) + dot(drug_out, wt_drug) + b1)
    h = batchnorm(h, gamma1, beta1)

    wt2, b2 = p["final_linear_layer_2"]
    y = dot(h, wt2) + b2
    return jnp.maximum(y, 0.0) + 0.1 * jnp.minimum(y, 0.0)   # custom leakyReLU


# ----------------------------------------------------------------------------
# Fused Pallas kernel: whole forward in one pallas_call, everything in VMEM
# ----------------------------------------------------------------------------
def make_fused_forward(params):
    params_flat, treedef = jax.tree_util.tree_flatten(params)
    n_p = len(params_flat)

    def kernel(*refs):
        mo0_ref, mo1_ref, drugs_ref, pa_ref = refs[:4]
        out_ref = refs[-1]
        p_vals = [r[...] for r in refs[4:4 + n_p]]
        p = jax.tree_util.tree_unflatten(treedef, p_vals)

        def dot(a, b):
            return jnp.dot(a, b, preferred_element_type=jnp.float32)

        out_ref[...] = _model_math(
            p, [mo0_ref[...], mo1_ref[...]], drugs_ref[...], pa_ref[...], dot)

    vmem = pl.BlockSpec(memory_space=pltpu.MemorySpace.VMEM)
    call = pl.pallas_call(
        kernel,
        out_shape=jax.ShapeDtypeStruct((BATCH, 1), jnp.float32),
        in_specs=[vmem] * (4 + n_p),
        out_specs=vmem,
    )

    @jax.jit
    def forward(mo0, mo1, drugs, path_act):
        return call(mo0.astype(jnp.float32), mo1.astype(jnp.float32),
                    drugs.astype(jnp.float32), path_act.astype(jnp.float32),
                    *params_flat)

    return forward


def reference_forward(params, mo_ccl_input, drugs_input, path_act_input):
    def dot(a, b):
        return jnp.dot(a, b, precision=jax.lax.Precision.HIGHEST)
    return _model_math(params, list(mo_ccl_input),
                       drugs_input.astype(jnp.float32),
                       path_act_input.astype(jnp.float32), dot)


# ----------------------------------------------------------------------------
if __name__ == "__main__":
    key = jax.random.PRNGKey(0)
    k1, k2, k3, k4 = jax.random.split(key, 4)

    mo_ccl_input = [
        jax.random.normal(k1, (BATCH, GENES_DIM[0]), jnp.float32),
        jax.random.normal(k2, (BATCH, GENES_DIM[1]), jnp.float32),
    ]
    drugs_input = jax.random.normal(k3, (BATCH, sum(DRUGS_DIM)), jnp.float32)
    path_act_input = jax.random.normal(k4, (BATCH, N_TERMS), jnp.float32)

    params = build_params(seed=42)
    forward = make_fused_forward(params)

    out = forward(mo_ccl_input[0], mo_ccl_input[1], drugs_input, path_act_input)
    out = jax.block_until_ready(out)
    assert out.shape == (BATCH, 1) and out.dtype == jnp.float32

    # Sanity check against a pure-JAX reference of the same math.
    ref = reference_forward(params, mo_ccl_input, drugs_input, path_act_input)
    err = float(jnp.max(jnp.abs(out - ref)))
    assert err < 1e-2, f"mismatch vs reference: {err}"

    # TODO(synk): BatchNorm running statistics (inference mode) are not tracked;
    # forward uses training-mode batch statistics like the PyTorch module default.
    print("KERNEL_OK")
</pallas_src>

<mosaic_0001>
module attributes {stable_mosaic.version = 11 : i64} {
  func.func @kernel(%arg0: memref<8x16xf32, #tpu.memory_space<vmem>>, %arg1: memref<8x16xf32, #tpu.memory_space<vmem>>, %arg2: memref<8x24xf32, #tpu.memory_space<vmem>>, %arg3: memref<8x3xf32, #tpu.memory_space<vmem>>, %arg4: memref<1x8xf32, #tpu.memory_space<vmem>>, %arg5: memref<1x8xf32, #tpu.memory_space<vmem>>, %arg6: memref<3x8xf32, #tpu.memory_space<vmem>>, %arg7: memref<2x8xf32, #tpu.memory_space<vmem>>, %arg8: memref<1x8xf32, #tpu.memory_space<vmem>>, %arg9: memref<1x8xf32, #tpu.memory_space<vmem>>, %arg10: memref<1x8xf32, #tpu.memory_space<vmem>>, %arg11: memref<1x8xf32, #tpu.memory_space<vmem>>, %arg12: memref<2x8xf32, #tpu.memory_space<vmem>>, %arg13: memref<1x8xf32, #tpu.memory_space<vmem>>, %arg14: memref<1x8xf32, #tpu.memory_space<vmem>>, %arg15: memref<1x8xf32, #tpu.memory_space<vmem>>, %arg16: memref<1x8xf32, #tpu.memory_space<vmem>>, %arg17: memref<8x8xf32, #tpu.memory_space<vmem>>, %arg18: memref<8x8xf32, #tpu.memory_space<vmem>>, %arg19: memref<4x8xf32, #tpu.memory_space<vmem>>, %arg20: memref<2x8xf32, #tpu.memory_space<vmem>>, %arg21: memref<1x8xf32, #tpu.memory_space<vmem>>, %arg22: memref<1x8xf32, #tpu.memory_space<vmem>>, %arg23: memref<1x8xf32, #tpu.memory_space<vmem>>, %arg24: memref<1x8xf32, #tpu.memory_space<vmem>>, %arg25: memref<1x16xf32, #tpu.memory_space<vmem>>, %arg26: memref<1x16xf32, #tpu.memory_space<vmem>>, %arg27: memref<1x8xf32, #tpu.memory_space<vmem>>, %arg28: memref<1x8xf32, #tpu.memory_space<vmem>>, %arg29: memref<24x16xf32, #tpu.memory_space<vmem>>, %arg30: memref<1x16xf32, #tpu.memory_space<vmem>>, %arg31: memref<16x8xf32, #tpu.memory_space<vmem>>, %arg32: memref<1x8xf32, #tpu.memory_space<vmem>>, %arg33: memref<1x8xf32, #tpu.memory_space<vmem>>, %arg34: memref<1x8xf32, #tpu.memory_space<vmem>>, %arg35: memref<8x8xf32, #tpu.memory_space<vmem>>, %arg36: memref<8x8xf32, #tpu.memory_space<vmem>>, %arg37: memref<1x8xf32, #tpu.memory_space<vmem>>, %arg38: memref<8x1xf32, #tpu.memory_space<vmem>>, %arg39: memref<1x1xf32, #tpu.memory_space<vmem>>, %arg40: memref<16x4xf32, #tpu.memory_space<vmem>>, %arg41: memref<1x4xf32, #tpu.memory_space<vmem>>, %arg42: memref<16x9xf32, #tpu.memory_space<vmem>>, %arg43: memref<1x9xf32, #tpu.memory_space<vmem>>, %arg44: memref<8x1xf32, #tpu.memory_space<vmem>>) attributes {dimension_semantics = [], scalar_prefetch = 0 : i64, scratch_operands = 0 : i64, tpu.core_type = #tpu.core_type<tc>} {
    %c0 = arith.constant 0 : index
    %c0_0 = arith.constant 0 : index
    %0 = vector.load %arg4[%c0, %c0_0] : memref<1x8xf32, #tpu.memory_space<vmem>>, vector<1x8xf32>
    %c0_1 = arith.constant 0 : index
    %c0_2 = arith.constant 0 : index
    %1 = vector.load %arg5[%c0_1, %c0_2] : memref<1x8xf32, #tpu.memory_space<vmem>>, vector<1x8xf32>
    %c0_3 = arith.constant 0 : index
    %c0_4 = arith.constant 0 : index
    %2 = vector.load %arg6[%c0_3, %c0_4] : memref<3x8xf32, #tpu.memory_space<vmem>>, vector<3x8xf32>
    %c0_5 = arith.constant 0 : index
    %c0_6 = arith.constant 0 : index
    %3 = vector.load %arg7[%c0_5, %c0_6] : memref<2x8xf32, #tpu.memory_space<vmem>>, vector<2x8xf32>
    %c0_7 = arith.constant 0 : index
    %c0_8 = arith.constant 0 : index
    %4 = vector.load %arg8[%c0_7, %c0_8] : memref<1x8xf32, #tpu.memory_space<vmem>>, vector<1x8xf32>
    %c0_9 = arith.constant 0 : index
    %c0_10 = arith.constant 0 : index
    %5 = vector.load %arg9[%c0_9, %c0_10] : memref<1x8xf32, #tpu.memory_space<vmem>>, vector<1x8xf32>
    %c0_11 = arith.constant 0 : index
    %c0_12 = arith.constant 0 : index
    %6 = vector.load %arg10[%c0_11, %c0_12] : memref<1x8xf32, #tpu.memory_space<vmem>>, vector<1x8xf32>
    %c0_13 = arith.constant 0 : index
    %c0_14 = arith.constant 0 : index
    %7 = vector.load %arg11[%c0_13, %c0_14] : memref<1x8xf32, #tpu.memory_space<vmem>>, vector<1x8xf32>
    %c0_15 = arith.constant 0 : index
    %c0_16 = arith.constant 0 : index
    %8 = vector.load %arg12[%c0_15, %c0_16] : memref<2x8xf32, #tpu.memory_space<vmem>>, vector<2x8xf32>
    %c0_17 = arith.constant 0 : index
    %c0_18 = arith.constant 0 : index
    %9 = vector.load %arg13[%c0_17, %c0_18] : memref<1x8xf32, #tpu.memory_space<vmem>>, vector<1x8xf32>
    %c0_19 = arith.constant 0 : index
    %c0_20 = arith.constant 0 : index
    %10 = vector.load %arg14[%c0_19, %c0_20] : memref<1x8xf32, #tpu.memory_space<vmem>>, vector<1x8xf32>
    %c0_21 = arith.constant 0 : index
    %c0_22 = arith.constant 0 : index
    %11 = vector.load %arg15[%c0_21, %c0_22] : memref<1x8xf32, #tpu.memory_space<vmem>>, vector<1x8xf32>
    %c0_23 = arith.constant 0 : index
    %c0_24 = arith.constant 0 : index
    %12 = vector.load %arg16[%c0_23, %c0_24] : memref<1x8xf32, #tpu.memory_space<vmem>>, vector<1x8xf32>
    %c0_25 = arith.constant 0 : index
    %c0_26 = arith.constant 0 : index
    %13 = vector.load %arg17[%c0_25, %c0_26] : memref<8x8xf32, #tpu.memory_space<vmem>>, vector<8x8xf32>
    %c0_27 = arith.constant 0 : index
    %c0_28 = arith.constant 0 : index
    %14 = vector.load %arg18[%c0_27, %c0_28] : memref<8x8xf32, #tpu.memory_space<vmem>>, vector<8x8xf32>
    %c0_29 = arith.constant 0 : index
    %c0_30 = arith.constant 0 : index
    %15 = vector.load %arg19[%c0_29, %c0_30] : memref<4x8xf32, #tpu.memory_space<vmem>>, vector<4x8xf32>
    %c0_31 = arith.constant 0 : index
    %c0_32 = arith.constant 0 : index
    %16 = vector.load %arg20[%c0_31, %c0_32] : memref<2x8xf32, #tpu.memory_space<vmem>>, vector<2x8xf32>
    %c0_33 = arith.constant 0 : index
    %c0_34 = arith.constant 0 : index
    %17 = vector.load %arg21[%c0_33, %c0_34] : memref<1x8xf32, #tpu.memory_space<vmem>>, vector<1x8xf32>
    %c0_35 = arith.constant 0 : index
    %c0_36 = arith.constant 0 : index
    %18 = vector.load %arg22[%c0_35, %c0_36] : memref<1x8xf32, #tpu.memory_space<vmem>>, vector<1x8xf32>
    %c0_37 = arith.constant 0 : index
    %c0_38 = arith.constant 0 : index
    %19 = vector.load %arg23[%c0_37, %c0_38] : memref<1x8xf32, #tpu.memory_space<vmem>>, vector<1x8xf32>
    %c0_39 = arith.constant 0 : index
    %c0_40 = arith.constant 0 : index
    %20 = vector.load %arg24[%c0_39, %c0_40] : memref<1x8xf32, #tpu.memory_space<vmem>>, vector<1x8xf32>
    %c0_41 = arith.constant 0 : index
    %c0_42 = arith.constant 0 : index
    %21 = vector.load %arg25[%c0_41, %c0_42] : memref<1x16xf32, #tpu.memory_space<vmem>>, vector<1x16xf32>
    %c0_43 = arith.constant 0 : index
    %c0_44 = arith.constant 0 : index
    %22 = vector.load %arg26[%c0_43, %c0_44] : memref<1x16xf32, #tpu.memory_space<vmem>>, vector<1x16xf32>
    %c0_45 = arith.constant 0 : index
    %c0_46 = arith.constant 0 : index
    %23 = vector.load %arg27[%c0_45, %c0_46] : memref<1x8xf32, #tpu.memory_space<vmem>>, vector<1x8xf32>
    %c0_47 = arith.constant 0 : index
    %c0_48 = arith.constant 0 : index
    %24 = vector.load %arg28[%c0_47, %c0_48] : memref<1x8xf32, #tpu.memory_space<vmem>>, vector<1x8xf32>
    %c0_49 = arith.constant 0 : index
    %c0_50 = arith.constant 0 : index
    %25 = vector.load %arg29[%c0_49, %c0_50] : memref<24x16xf32, #tpu.memory_space<vmem>>, vector<24x16xf32>
    %c0_51 = arith.constant 0 : index
    %c0_52 = arith.constant 0 : index
    %26 = vector.load %arg30[%c0_51, %c0_52] : memref<1x16xf32, #tpu.memory_space<vmem>>, vector<1x16xf32>
    %c0_53 = arith.constant 0 : index
    %c0_54 = arith.constant 0 : index
    %27 = vector.load %arg31[%c0_53, %c0_54] : memref<16x8xf32, #tpu.memory_space<vmem>>, vector<16x8xf32>
    %c0_55 = arith.constant 0 : index
    %c0_56 = arith.constant 0 : index
    %28 = vector.load %arg32[%c0_55, %c0_56] : memref<1x8xf32, #tpu.memory_space<vmem>>, vector<1x8xf32>
    %c0_57 = arith.constant 0 : index
    %c0_58 = arith.constant 0 : index
    %29 = vector.load %arg33[%c0_57, %c0_58] : memref<1x8xf32, #tpu.memory_space<vmem>>, vector<1x8xf32>
    %c0_59 = arith.constant 0 : index
    %c0_60 = arith.constant 0 : index
    %30 = vector.load %arg34[%c0_59, %c0_60] : memref<1x8xf32, #tpu.memory_space<vmem>>, vector<1x8xf32>
    %c0_61 = arith.constant 0 : index
    %c0_62 = arith.constant 0 : index
    %31 = vector.load %arg35[%c0_61, %c0_62] : memref<8x8xf32, #tpu.memory_space<vmem>>, vector<8x8xf32>
    %c0_63 = arith.constant 0 : index
    %c0_64 = arith.constant 0 : index
    %32 = vector.load %arg36[%c0_63, %c0_64] : memref<8x8xf32, #tpu.memory_space<vmem>>, vector<8x8xf32>
    %c0_65 = arith.constant 0 : index
    %c0_66 = arith.constant 0 : index
    %33 = vector.load %arg37[%c0_65, %c0_66] : memref<1x8xf32, #tpu.memory_space<vmem>>, vector<1x8xf32>
    %c0_67 = arith.constant 0 : index
    %c0_68 = arith.constant 0 : index
    %34 = vector.load %arg38[%c0_67, %c0_68] : memref<8x1xf32, #tpu.memory_space<vmem>>, vector<8x1xf32>
    %c0_69 = arith.constant 0 : index
    %c0_70 = arith.constant 0 : index
    %35 = vector.load %arg39[%c0_69, %c0_70] : memref<1x1xf32, #tpu.memory_space<vmem>>, vector<1x1xf32>
    %c0_71 = arith.constant 0 : index
    %c0_72 = arith.constant 0 : index
    %36 = vector.load %arg40[%c0_71, %c0_72] : memref<16x4xf32, #tpu.memory_space<vmem>>, vector<16x4xf32>
    %c0_73 = arith.constant 0 : index
    %c0_74 = arith.constant 0 : index
    %37 = vector.load %arg41[%c0_73, %c0_74] : memref<1x4xf32, #tpu.memory_space<vmem>>, vector<1x4xf32>
    %c0_75 = arith.constant 0 : index
    %c0_76 = arith.constant 0 : index
    %38 = vector.load %arg42[%c0_75, %c0_76] : memref<16x9xf32, #tpu.memory_space<vmem>>, vector<16x9xf32>
    %c0_77 = arith.constant 0 : index
    %c0_78 = arith.constant 0 : index
    %39 = vector.load %arg43[%c0_77, %c0_78] : memref<1x9xf32, #tpu.memory_space<vmem>>, vector<1x9xf32>
    %c0_79 = arith.constant 0 : index
    %c0_80 = arith.constant 0 : index
    %40 = vector.load %arg0[%c0_79, %c0_80] : memref<8x16xf32, #tpu.memory_space<vmem>>, vector<8x16xf32>
    %c0_81 = arith.constant 0 : index
    %c0_82 = arith.constant 0 : index
    %41 = vector.load %arg1[%c0_81, %c0_82] : memref<8x16xf32, #tpu.memory_space<vmem>>, vector<8x16xf32>
    %c0_83 = arith.constant 0 : index
    %c0_84 = arith.constant 0 : index
    %42 = vector.load %arg2[%c0_83, %c0_84] : memref<8x24xf32, #tpu.memory_space<vmem>>, vector<8x24xf32>
    %c0_85 = arith.constant 0 : index
    %c0_86 = arith.constant 0 : index
    %43 = vector.load %arg3[%c0_85, %c0_86] : memref<8x3xf32, #tpu.memory_space<vmem>>, vector<8x3xf32>
    %cst = arith.constant dense<0.000000e+00> : vector<8x9xf32>
    %44 = tpu.matmul %40, %38, %cst {dimension_numbers = #tpu.dot_dimension_numbers<[1], [0], [0], [1], [0, 0, 1, 1], [], []>} : vector<8x16xf32>, vector<16x9xf32>, vector<8x9xf32> -> vector<8x9xf32>
    %45 = vector.broadcast %39 : vector<1x9xf32> to vector<8x9xf32>
    %46 = arith.addf %44, %45 : vector<8x9xf32>
    %47 = vector.extract_strided_slice %46 {offsets = [0, 0], sizes = [8, 3], strides = [1, 1]} : vector<8x9xf32> to vector<8x3xf32>
    %48 = vector.extract_strided_slice %46 {offsets = [0, 3], sizes = [8, 2], strides = [1, 1]} : vector<8x9xf32> to vector<8x2xf32>
    %49 = vector.extract_strided_slice %46 {offsets = [0, 5], sizes = [8, 4], strides = [1, 1]} : vector<8x9xf32> to vector<8x4xf32>
    %cst_87 = arith.constant dense<0.000000e+00> : vector<8x4xf32>
    %50 = tpu.matmul %41, %36, %cst_87 {dimension_numbers = #tpu.dot_dimension_numbers<[1], [0], [0], [1], [0, 0, 1, 1], [], []>} : vector<8x16xf32>, vector<16x4xf32>, vector<8x4xf32> -> vector<8x4xf32>
    %51 = vector.broadcast %37 : vector<1x4xf32> to vector<8x4xf32>
    %52 = arith.addf %50, %51 : vector<8x4xf32>
    %53 = vector.extract_strided_slice %52 {offsets = [0, 0], sizes = [8, 2], strides = [1, 1]} : vector<8x4xf32> to vector<8x2xf32>
    %54 = vector.extract_strided_slice %52 {offsets = [0, 2], sizes = [8, 2], strides = [1, 1]} : vector<8x4xf32> to vector<8x2xf32>
    %cst_88 = arith.constant dense<0.000000e+00> : vector<8x8xf32>
    %55 = tpu.matmul %47, %2, %cst_88 {dimension_numbers = #tpu.dot_dimension_numbers<[1], [0], [0], [1], [0, 0, 1, 1], [], []>} : vector<8x3xf32>, vector<3x8xf32>, vector<8x8xf32> -> vector<8x8xf32>
    %cst_89 = arith.constant dense<0.000000e+00> : vector<8x8xf32>
    %56 = tpu.matmul %53, %3, %cst_89 {dimension_numbers = #tpu.dot_dimension_numbers<[1], [0], [0], [1], [0, 0, 1, 1], [], []>} : vector<8x2xf32>, vector<2x8xf32>, vector<8x8xf32> -> vector<8x8xf32>
    %57 = arith.addf %55, %56 : vector<8x8xf32>
    %58 = vector.extract_strided_slice %43 {offsets = [0, 0], sizes = [8, 1], strides = [1, 1]} : vector<8x3xf32> to vector<8x1xf32>
    %59 = vector.broadcast %58 : vector<8x1xf32> to vector<8x8xf32>
    %60 = vector.broadcast %4 : vector<1x8xf32> to vector<8x8xf32>
    %61 = arith.mulf %59, %60 : vector<8x8xf32>
    %62 = arith.addf %57, %61 : vector<8x8xf32>
    %63 = vector.broadcast %5 : vector<1x8xf32> to vector<8x8xf32>
    %64 = arith.addf %62, %63 : vector<8x8xf32>
    %65 = math.tanh %64 : vector<8x8xf32>
    %cst_90 = arith.constant dense<0.000000e+00> : vector<8xf32>
    %66 = vector.multi_reduction <add>, %65, %cst_90 [0] : vector<8x8xf32> to vector<8xf32>
    %67 = vector.shape_cast %66 : vector<8xf32> to vector<1x8xf32>
    %cst_91 = arith.constant 8.000000e+00 : f32
    %68 = vector.broadcast %cst_91 : f32 to vector<1x8xf32>
    %69 = arith.divf %67, %68 : vector<1x8xf32>
    %70 = vector.broadcast %69 : vector<1x8xf32> to vector<8x8xf32>
    %71 = arith.subf %65, %70 : vector<8x8xf32>
    %72 = arith.mulf %71, %71 : vector<8x8xf32>
    %cst_92 = arith.constant dense<0.000000e+00> : vector<8xf32>
    %73 = vector.multi_reduction <add>, %72, %cst_92 [0] : vector<8x8xf32> to vector<8xf32>
    %74 = vector.shape_cast %73 : vector<8xf32> to vector<1x8xf32>
    %cst_93 = arith.constant 8.000000e+00 : f32
    %75 = vector.broadcast %cst_93 : f32 to vector<1x8xf32>
    %76 = arith.divf %74, %75 : vector<1x8xf32>
    %77 = vector.broadcast %69 : vector<1x8xf32> to vector<8x8xf32>
    %78 = arith.subf %65, %77 : vector<8x8xf32>
    %cst_94 = arith.constant 9.99999974E-6 : f32
    %79 = vector.broadcast %cst_94 : f32 to vector<1x8xf32>
    %80 = arith.addf %76, %79 : vector<1x8xf32>
    %81 = math.rsqrt %80 : vector<1x8xf32>
    %82 = vector.broadcast %81 : vector<1x8xf32> to vector<8x8xf32>
    %83 = arith.mulf %78, %82 : vector<8x8xf32>
    %84 = vector.broadcast %0 : vector<1x8xf32> to vector<8x8xf32>
    %85 = arith.mulf %83, %84 : vector<8x8xf32>
    %86 = vector.broadcast %1 : vector<1x8xf32> to vector<8x8xf32>
    %87 = arith.addf %85, %86 : vector<8x8xf32>
    %cst_95 = arith.constant dense<0.000000e+00> : vector<8x8xf32>
    %88 = tpu.matmul %48, %8, %cst_95 {dimension_numbers = #tpu.dot_dimension_numbers<[1], [0], [0], [1], [0, 0, 1, 1], [], []>} : vector<8x2xf32>, vector<2x8xf32>, vector<8x8xf32> -> vector<8x8xf32>
    %89 = vector.extract_strided_slice %43 {offsets = [0, 1], sizes = [8, 1], strides = [1, 1]} : vector<8x3xf32> to vector<8x1xf32>
    %90 = vector.broadcast %89 : vector<8x1xf32> to vector<8x8xf32>
    %91 = vector.broadcast %9 : vector<1x8xf32> to vector<8x8xf32>
    %92 = arith.mulf %90, %91 : vector<8x8xf32>
    %93 = arith.addf %88, %92 : vector<8x8xf32>
    %94 = vector.broadcast %10 : vector<1x8xf32> to vector<8x8xf32>
    %95 = arith.addf %93, %94 : vector<8x8xf32>
    %96 = math.tanh %95 : vector<8x8xf32>
    %cst_96 = arith.constant dense<0.000000e+00> : vector<8xf32>
    %97 = vector.multi_reduction <add>, %96, %cst_96 [0] : vector<8x8xf32> to vector<8xf32>
    %98 = vector.shape_cast %97 : vector<8xf32> to vector<1x8xf32>
    %cst_97 = arith.constant 8.000000e+00 : f32
    %99 = vector.broadcast %cst_97 : f32 to vector<1x8xf32>
    %100 = arith.divf %98, %99 : vector<1x8xf32>
    %101 = vector.broadcast %100 : vector<1x8xf32> to vector<8x8xf32>
    %102 = arith.subf %96, %101 : vector<8x8xf32>
    %103 = arith.mulf %102, %102 : vector<8x8xf32>
    %cst_98 = arith.constant dense<0.000000e+00> : vector<8xf32>
    %104 = vector.multi_reduction <add>, %103, %cst_98 [0] : vector<8x8xf32> to vector<8xf32>
    %105 = vector.shape_cast %104 : vector<8xf32> to vector<1x8xf32>
    %cst_99 = arith.constant 8.000000e+00 : f32
    %106 = vector.broadcast %cst_99 : f32 to vector<1x8xf32>
    %107 = arith.divf %105, %106 : vector<1x8xf32>
    %108 = vector.broadcast %100 : vector<1x8xf32> to vector<8x8xf32>
    %109 = arith.subf %96, %108 : vector<8x8xf32>
    %cst_100 = arith.constant 9.99999974E-6 : f32
    %110 = vector.broadcast %cst_100 : f32 to vector<1x8xf32>
    %111 = arith.addf %107, %110 : vector<1x8xf32>
    %112 = math.rsqrt %111 : vector<1x8xf32>
    %113 = vector.broadcast %112 : vector<1x8xf32> to vector<8x8xf32>
    %114 = arith.mulf %109, %113 : vector<8x8xf32>
    %115 = vector.broadcast %6 : vector<1x8xf32> to vector<8x8xf32>
    %116 = arith.mulf %114, %115 : vector<8x8xf32>
    %117 = vector.broadcast %7 : vector<1x8xf32> to vector<8x8xf32>
    %118 = arith.addf %116, %117 : vector<8x8xf32>
    %cst_101 = arith.constant dense<0.000000e+00> : vector<8x8xf32>
    %119 = tpu.matmul %87, %13, %cst_101 {dimension_numbers = #tpu.dot_dimension_numbers<[1], [0], [0], [1], [0, 0, 1, 1], [], []>} : vector<8x8xf32>, vector<8x8xf32>, vector<8x8xf32> -> vector<8x8xf32>
    %cst_102 = arith.constant dense<0.000000e+00> : vector<8x8xf32>
    %120 = tpu.matmul %118, %14, %cst_102 {dimension_numbers = #tpu.dot_dimension_numbers<[1], [0], [0], [1], [0, 0, 1, 1], [], []>} : vector<8x8xf32>, vector<8x8xf32>, vector<8x8xf32> -> vector<8x8xf32>
    %121 = arith.addf %119, %120 : vector<8x8xf32>
    %cst_103 = arith.constant dense<0.000000e+00> : vector<8x8xf32>
    %122 = tpu.matmul %49, %15, %cst_103 {dimension_numbers = #tpu.dot_dimension_numbers<[1], [0], [0], [1], [0, 0, 1, 1], [], []>} : vector<8x4xf32>, vector<4x8xf32>, vector<8x8xf32> -> vector<8x8xf32>
    %123 = arith.addf %121, %122 : vector<8x8xf32>
    %cst_104 = arith.constant dense<0.000000e+00> : vector<8x8xf32>
    %124 = tpu.matmul %54, %16, %cst_104 {dimension_numbers = #tpu.dot_dimension_numbers<[1], [0], [0], [1], [0, 0, 1, 1], [], []>} : vector<8x2xf32>, vector<2x8xf32>, vector<8x8xf32> -> vector<8x8xf32>
    %125 = arith.addf %123, %124 : vector<8x8xf32>
    %126 = vector.extract_strided_slice %43 {offsets = [0, 2], sizes = [8, 1], strides = [1, 1]} : vector<8x3xf32> to vector<8x1xf32>
    %127 = vector.broadcast %126 : vector<8x1xf32> to vector<8x8xf32>
    %128 = vector.broadcast %17 : vector<1x8xf32> to vector<8x8xf32>
    %129 = arith.mulf %127, %128 : vector<8x8xf32>
    %130 = arith.addf %125, %129 : vector<8x8xf32>
    %131 = vector.extract_strided_slice %43 {offsets = [0, 0], sizes = [8, 1], strides = [1, 1]} : vector<8x3xf32> to vector<8x1xf32>
    %132 = vector.broadcast %131 : vector<8x1xf32> to vector<8x8xf32>
    %133 = vector.broadcast %18 : vector<1x8xf32> to vector<8x8xf32>
    %134 = arith.mulf %132, %133 : vector<8x8xf32>
    %135 = arith.addf %130, %134 : vector<8x8xf32>
    %136 = vector.extract_strided_slice %43 {offsets = [0, 1], sizes = [8, 1], strides = [1, 1]} : vector<8x3xf32> to vector<8x1xf32>
    %137 = vector.broadcast %136 : vector<8x1xf32> to vector<8x8xf32>
    %138 = vector.broadcast %19 : vector<1x8xf32> to vector<8x8xf32>
    %139 = arith.mulf %137, %138 : vector<8x8xf32>
    %140 = arith.addf %135, %139 : vector<8x8xf32>
    %141 = vector.broadcast %20 : vector<1x8xf32> to vector<8x8xf32>
    %142 = arith.addf %140, %141 : vector<8x8xf32>
    %143 = math.tanh %142 : vector<8x8xf32>
    %cst_105 = arith.constant dense<0.000000e+00> : vector<8xf32>
    %144 = vector.multi_reduction <add>, %143, %cst_105 [0] : vector<8x8xf32> to vector<8xf32>
    %145 = vector.shape_cast %144 : vector<8xf32> to vector<1x8xf32>
    %cst_106 = arith.constant 8.000000e+00 : f32
    %146 = vector.broadcast %cst_106 : f32 to vector<1x8xf32>
    %147 = arith.divf %145, %146 : vector<1x8xf32>
    %148 = vector.broadcast %147 : vector<1x8xf32> to vector<8x8xf32>
    %149 = arith.subf %143, %148 : vector<8x8xf32>
    %150 = arith.mulf %149, %149 : vector<8x8xf32>
    %cst_107 = arith.constant dense<0.000000e+00> : vector<8xf32>
    %151 = vector.multi_reduction <add>, %150, %cst_107 [0] : vector<8x8xf32> to vector<8xf32>
    %152 = vector.shape_cast %151 : vector<8xf32> to vector<1x8xf32>
    %cst_108 = arith.constant 8.000000e+00 : f32
    %153 = vector.broadcast %cst_108 : f32 to vector<1x8xf32>
    %154 = arith.divf %152, %153 : vector<1x8xf32>
    %155 = vector.broadcast %147 : vector<1x8xf32> to vector<8x8xf32>
    %156 = arith.subf %143, %155 : vector<8x8xf32>
    %cst_109 = arith.constant 9.99999974E-6 : f32
    %157 = vector.broadcast %cst_109 : f32 to vector<1x8xf32>
    %158 = arith.addf %154, %157 : vector<1x8xf32>
    %159 = math.rsqrt %158 : vector<1x8xf32>
    %160 = vector.broadcast %159 : vector<1x8xf32> to vector<8x8xf32>
    %161 = arith.mulf %156, %160 : vector<8x8xf32>
    %162 = vector.broadcast %11 : vector<1x8xf32> to vector<8x8xf32>
    %163 = arith.mulf %161, %162 : vector<8x8xf32>
    %164 = vector.broadcast %12 : vector<1x8xf32> to vector<8x8xf32>
    %165 = arith.addf %163, %164 : vector<8x8xf32>
    %cst_110 = arith.constant dense<0.000000e+00> : vector<8x16xf32>
    %166 = tpu.matmul %42, %25, %cst_110 {dimension_numbers = #tpu.dot_dimension_numbers<[1], [0], [0], [1], [0, 0, 1, 1], [], []>} : vector<8x24xf32>, vector<24x16xf32>, vector<8x16xf32> -> vector<8x16xf32>
    %167 = vector.broadcast %26 : vector<1x16xf32> to vector<8x16xf32>
    %168 = arith.addf %166, %167 : vector<8x16xf32>
    %169 = math.tanh %168 : vector<8x16xf32>
    %cst_111 = arith.constant dense<0.000000e+00> : vector<16xf32>
    %170 = vector.multi_reduction <add>, %169, %cst_111 [0] : vector<8x16xf32> to vector<16xf32>
    %171 = vector.shape_cast %170 : vector<16xf32> to vector<1x16xf32>
    %cst_112 = arith.constant 8.000000e+00 : f32
    %172 = vector.broadcast %cst_112 : f32 to vector<1x16xf32>
    %173 = arith.divf %171, %172 : vector<1x16xf32>
    %174 = vector.broadcast %173 : vector<1x16xf32> to vector<8x16xf32>
    %175 = arith.subf %169, %174 : vector<8x16xf32>
    %176 = arith.mulf %175, %175 : vector<8x16xf32>
    %cst_113 = arith.constant dense<0.000000e+00> : vector<16xf32>
    %177 = vector.multi_reduction <add>, %176, %cst_113 [0] : vector<8x16xf32> to vector<16xf32>
    %178 = vector.shape_cast %177 : vector<16xf32> to vector<1x16xf32>
    %cst_114 = arith.constant 8.000000e+00 : f32
    %179 = vector.broadcast %cst_114 : f32 to vector<1x16xf32>
    %180 = arith.divf %178, %179 : vector<1x16xf32>
    %181 = vector.broadcast %173 : vector<1x16xf32> to vector<8x16xf32>
    %182 = arith.subf %169, %181 : vector<8x16xf32>
    %cst_115 = arith.constant 9.99999974E-6 : f32
    %183 = vector.broadcast %cst_115 : f32 to vector<1x16xf32>
    %184 = arith.addf %180, %183 : vector<1x16xf32>
    %185 = math.rsqrt %184 : vector<1x16xf32>
    %186 = vector.broadcast %185 : vector<1x16xf32> to vector<8x16xf32>
    %187 = arith.mulf %182, %186 : vector<8x16xf32>
    %188 = vector.broadcast %21 : vector<1x16xf32> to vector<8x16xf32>
    %189 = arith.mulf %187, %188 : vector<8x16xf32>
    %190 = vector.broadcast %22 : vector<1x16xf32> to vector<8x16xf32>
    %191 = arith.addf %189, %190 : vector<8x16xf32>
    %cst_116 = arith.constant dense<0.000000e+00> : vector<8x8xf32>
    %192 = tpu.matmul %191, %27, %cst_116 {dimension_numbers = #tpu.dot_dimension_numbers<[1], [0], [0], [1], [0, 0, 1, 1], [], []>} : vector<8x16xf32>, vector<16x8xf32>, vector<8x8xf32> -> vector<8x8xf32>
    %193 = vector.broadcast %28 : vector<1x8xf32> to vector<8x8xf32>
    %194 = arith.addf %192, %193 : vector<8x8xf32>
    %195 = math.tanh %194 : vector<8x8xf32>
    %cst_117 = arith.constant dense<0.000000e+00> : vector<8xf32>
    %196 = vector.multi_reduction <add>, %195, %cst_117 [0] : vector<8x8xf32> to vector<8xf32>
    %197 = vector.shape_cast %196 : vector<8xf32> to vector<1x8xf32>
    %cst_118 = arith.constant 8.000000e+00 : f32
    %198 = vector.broadcast %cst_118 : f32 to vector<1x8xf32>
    %199 = arith.divf %197, %198 : vector<1x8xf32>
    %200 = vector.broadcast %199 : vector<1x8xf32> to vector<8x8xf32>
    %201 = arith.subf %195, %200 : vector<8x8xf32>
    %202 = arith.mulf %201, %201 : vector<8x8xf32>
    %cst_119 = arith.constant dense<0.000000e+00> : vector<8xf32>
    %203 = vector.multi_reduction <add>, %202, %cst_119 [0] : vector<8x8xf32> to vector<8xf32>
    %204 = vector.shape_cast %203 : vector<8xf32> to vector<1x8xf32>
    %cst_120 = arith.constant 8.000000e+00 : f32
    %205 = vector.broadcast %cst_120 : f32 to vector<1x8xf32>
    %206 = arith.divf %204, %205 : vector<1x8xf32>
    %207 = vector.broadcast %199 : vector<1x8xf32> to vector<8x8xf32>
    %208 = arith.subf %195, %207 : vector<8x8xf32>
    %cst_121 = arith.constant 9.99999974E-6 : f32
    %209 = vector.broadcast %cst_121 : f32 to vector<1x8xf32>
    %210 = arith.addf %206, %209 : vector<1x8xf32>
    %211 = math.rsqrt %210 : vector<1x8xf32>
    %212 = vector.broadcast %211 : vector<1x8xf32> to vector<8x8xf32>
    %213 = arith.mulf %208, %212 : vector<8x8xf32>
    %214 = vector.broadcast %23 : vector<1x8xf32> to vector<8x8xf32>
    %215 = arith.mulf %213, %214 : vector<8x8xf32>
    %216 = vector.broadcast %24 : vector<1x8xf32> to vector<8x8xf32>
    %217 = arith.addf %215, %216 : vector<8x8xf32>
    %cst_122 = arith.constant dense<0.000000e+00> : vector<8x8xf32>
    %218 = tpu.matmul %165, %31, %cst_122 {dimension_numbers = #tpu.dot_dimension_numbers<[1], [0], [0], [1], [0, 0, 1, 1], [], []>} : vector<8x8xf32>, vector<8x8xf32>, vector<8x8xf32> -> vector<8x8xf32>
    %cst_123 = arith.constant dense<0.000000e+00> : vector<8x8xf32>
    %219 = tpu.matmul %217, %32, %cst_123 {dimension_numbers = #tpu.dot_dimension_numbers<[1], [0], [0], [1], [0, 0, 1, 1], [], []>} : vector<8x8xf32>, vector<8x8xf32>, vector<8x8xf32> -> vector<8x8xf32>
    %220 = arith.addf %218, %219 : vector<8x8xf32>
    %221 = vector.broadcast %33 : vector<1x8xf32> to vector<8x8xf32>
    %222 = arith.addf %220, %221 : vector<8x8xf32>
    %223 = math.tanh %222 : vector<8x8xf32>
    %cst_124 = arith.constant dense<0.000000e+00> : vector<8xf32>
    %224 = vector.multi_reduction <add>, %223, %cst_124 [0] : vector<8x8xf32> to vector<8xf32>
    %225 = vector.shape_cast %224 : vector<8xf32> to vector<1x8xf32>
    %cst_125 = arith.constant 8.000000e+00 : f32
    %226 = vector.broadcast %cst_125 : f32 to vector<1x8xf32>
    %227 = arith.divf %225, %226 : vector<1x8xf32>
    %228 = vector.broadcast %227 : vector<1x8xf32> to vector<8x8xf32>
    %229 = arith.subf %223, %228 : vector<8x8xf32>
    %230 = arith.mulf %229, %229 : vector<8x8xf32>
    %cst_126 = arith.constant dense<0.000000e+00> : vector<8xf32>
    %231 = vector.multi_reduction <add>, %230, %cst_126 [0] : vector<8x8xf32> to vector<8xf32>
    %232 = vector.shape_cast %231 : vector<8xf32> to vector<1x8xf32>
    %cst_127 = arith.constant 8.000000e+00 : f32
    %233 = vector.broadcast %cst_127 : f32 to vector<1x8xf32>
    %234 = arith.divf %232, %233 : vector<1x8xf32>
    %235 = vector.broadcast %227 : vector<1x8xf32> to vector<8x8xf32>
    %236 = arith.subf %223, %235 : vector<8x8xf32>
    %cst_128 = arith.constant 9.99999974E-6 : f32
    %237 = vector.broadcast %cst_128 : f32 to vector<1x8xf32>
    %238 = arith.addf %234, %237 : vector<1x8xf32>
    %239 = math.rsqrt %238 : vector<1x8xf32>
    %240 = vector.broadcast %239 : vector<1x8xf32> to vector<8x8xf32>
    %241 = arith.mulf %236, %240 : vector<8x8xf32>
    %242 = vector.broadcast %29 : vector<1x8xf32> to vector<8x8xf32>
    %243 = arith.mulf %241, %242 : vector<8x8xf32>
    %244 = vector.broadcast %30 : vector<1x8xf32> to vector<8x8xf32>
    %245 = arith.addf %243, %244 : vector<8x8xf32>
    %cst_129 = arith.constant dense<0.000000e+00> : vector<8x1xf32>
    %246 = tpu.matmul %245, %34, %cst_129 {dimension_numbers = #tpu.dot_dimension_numbers<[1], [0], [0], [1], [0, 0, 1, 1], [], []>} : vector<8x8xf32>, vector<8x1xf32>, vector<8x1xf32> -> vector<8x1xf32>
    %247 = vector.broadcast %35 : vector<1x1xf32> to vector<8x1xf32>
    %248 = arith.addf %246, %247 : vector<8x1xf32>
    %cst_130 = arith.constant 0.000000e+00 : f32
    %249 = vector.broadcast %cst_130 : f32 to vector<8x1xf32>
    %250 = arith.maximumf %248, %249 : vector<8x1xf32>
    %cst_131 = arith.constant 0.000000e+00 : f32
    %251 = vector.broadcast %cst_131 : f32 to vector<8x1xf32>
    %252 = arith.minimumf %248, %251 : vector<8x1xf32>
    %cst_132 = arith.constant 1.000000e-01 : f32
    %253 = vector.broadcast %cst_132 : f32 to vector<8x1xf32>
    %254 = arith.mulf %253, %252 : vector<8x1xf32>
    %255 = arith.addf %250, %254 : vector<8x1xf32>
    %c0_133 = arith.constant 0 : index
    %c0_134 = arith.constant 0 : index
    %256 = vector.load %arg44[%c0_133, %c0_134] : memref<8x1xf32, #tpu.memory_space<vmem>>, vector<8x1xf32>
    tpu.vector_store %arg44[%c0_133, %c0_134], %255 {strides = array<i32>} : memref<8x1xf32, #tpu.memory_space<vmem>>, vector<8x1xf32>,
    return
  }
}

</mosaic_0001>

<llo_original>
// kernel: forward.1
$region0: #{forward.1}
  #allocation0 [shape = 'u32[]', space=smem, size = 0x4, offset = 0x4, fixed_abs, tag = 'smem constant byte address 0x4 - core index']
  #allocation1 [shape = 'u32[144,128]{1,0:T(1,128)}', space=vmem, size = 0x12000, scoped, tag = 'internal scratch']
  #allocation2 [shape = 'f32[1,1]{1,0:T(1,128)S(1)}', space=vmem, size = 0x200, scoped, tag = 'scoped memory for forward.1']
  %s0 = inlined_call_operand.smem [shape: u32[45], index: -1, kind: input, shape index: {}]
  %s1 = sld [smem:[%s0]]
  %s2 = scalar_lea.smem %s0, 1
  %s3 = sld [smem:[%s2]]
  %s4 = scalar_lea.smem %s0, 2
  %s5 = sld [smem:[%s4]]
  %s6 = scalar_lea.smem %s0, 3
  %s7 = sld [smem:[%s6]]
  %s8 = scalar_lea.smem %s0, 4
  %s9 = sld [smem:[%s8]]
  %s10 = scalar_lea.smem %s0, 5
  %s11 = sld [smem:[%s10]]
  %s12 = scalar_lea.smem %s0, 6
  %s13 = sld [smem:[%s12]]
  %s14 = scalar_lea.smem %s0, 7
  %s15 = sld [smem:[%s14]]
  %s16 = scalar_lea.smem %s0, 8
  %s17 = sld [smem:[%s16]]
  %s18 = scalar_lea.smem %s0, 9
  %s19 = sld [smem:[%s18]]
  %s20 = scalar_lea.smem %s0, 10
  %s21 = sld [smem:[%s20]]
  %s22 = scalar_lea.smem %s0, 11
  %s23 = sld [smem:[%s22]]
  %s24 = scalar_lea.smem %s0, 12
  %s25 = sld [smem:[%s24]]
  %s26 = scalar_lea.smem %s0, 13
  %s27 = sld [smem:[%s26]]
  %s28 = scalar_lea.smem %s0, 14
  %s29 = sld [smem:[%s28]]
  %s30 = scalar_lea.smem %s0, 15
  %s31 = sld [smem:[%s30]]
  %s32 = scalar_lea.smem %s0, 16
  %s33 = sld [smem:[%s32]]
  %s34 = scalar_lea.smem %s0, 17
  %s35 = sld [smem:[%s34]]
  %s36 = scalar_lea.smem %s0, 18
  %s37 = sld [smem:[%s36]]
  %s38 = scalar_lea.smem %s0, 19
  %s39 = sld [smem:[%s38]]
  %s40 = scalar_lea.smem %s0, 20
  %s41 = sld [smem:[%s40]]
  %s42 = scalar_lea.smem %s0, 21
  %s43 = sld [smem:[%s42]]
  %s44 = scalar_lea.smem %s0, 22
  %s45 = sld [smem:[%s44]]
  %s46 = scalar_lea.smem %s0, 23
  %s47 = sld [smem:[%s46]]
  %s48 = scalar_lea.smem %s0, 24
  %s49 = sld [smem:[%s48]]
  %s50 = scalar_lea.smem %s0, 25
  %s51 = sld [smem:[%s50]]
  %s52 = scalar_lea.smem %s0, 26
  %s53 = sld [smem:[%s52]]
  %s54 = scalar_lea.smem %s0, 27
  %s55 = sld [smem:[%s54]]
  %s56 = scalar_lea.smem %s0, 28
  %s57 = sld [smem:[%s56]]
  %s58 = scalar_lea.smem %s0, 29
  %s59 = sld [smem:[%s58]]
  %s60 = scalar_lea.smem %s0, 30
  %s61 = sld [smem:[%s60]]
  %s62 = scalar_lea.smem %s0, 31
  %s63 = sld [smem:[%s62]]
  %s64 = scalar_lea.smem %s0, 32
  %s65 = sld [smem:[%s64]]
  %s66 = scalar_lea.smem %s0, 33
  %s67 = sld [smem:[%s66]]
  %s68 = scalar_lea.smem %s0, 34
  %s69 = sld [smem:[%s68]]
  %s70 = scalar_lea.smem %s0, 35
  %s71 = sld [smem:[%s70]]
  %s72 = scalar_lea.smem %s0, 36
  %s73 = sld [smem:[%s72]]
  %s74 = scalar_lea.smem %s0, 37
  %s75 = sld [smem:[%s74]]
  %s76 = scalar_lea.smem %s0, 38
  %s77 = sld [smem:[%s76]]
  %s78 = scalar_lea.smem %s0, 39
  %s79 = sld [smem:[%s78]]
  %s80 = scalar_lea.smem %s0, 40
  %s81 = sld [smem:[%s80]]
  %s82 = scalar_lea.smem %s0, 41
  %s83 = sld [smem:[%s82]]
  %s84 = scalar_lea.smem %s0, 42
  %s85 = sld [smem:[%s84]]
  %s86 = scalar_lea.smem %s0, 43
  %s87 = sld [smem:[%s86]]
  %s88 = scalar_lea.smem %s0, 44
  %s89 = sld [smem:[%s88]]
  %s90 = sld [smem:[#allocation0]]
  $region254: #{forward.1} parent=0
    _
  %s92 = ssub.s32 1, %s90
  %s93 = scalar_select 0, %s92, %s90
  %v94 = vstv %s79
  %95 = vst [vmem:[#allocation2] sm:$0x1] %v94
  $region1: #{forward.1} parent=0
    #allocation3 [shape = 'u8[4096]{0}', space=vmem, size = 0x1000, scoped, tag = 'input window, operand 0, single buffered']
    #allocation4 [shape = 's32[1]{0}', space=sflag, size = 0x4, scoped, tag = 'scoped memory for forward.1']
    #allocation5 [shape = 'u8[4096]{0}', space=vmem, size = 0x1000, scoped, tag = 'input window, operand 1, single buffered']
    #allocation6 [shape = 's32[1]{0}', space=sflag, size = 0x4, scoped, tag = 'scoped memory for forward.1']
    #allocation7 [shape = 'u8[4096]{0}', space=vmem, size = 0x1000, scoped, tag = 'input window, operand 2, single buffered']
    #allocation8 [shape = 'u8[2048]{0}', space=vmem, size = 0x800, scoped, tag = 'input window, operand 6, single buffered']
    #allocation9 [shape = 's32[1]{0}', space=sflag, size = 0x4, scoped, tag = 'scoped memory for forward.1']
    #allocation10 [shape = 'u8[1024]{0}', space=vmem, size = 0x400, scoped, tag = 'input window, operand 7, single buffered']
    #allocation11 [shape = 'u8[512]{0}', space=vmem, size = 0x400, scoped, tag = 'input window, operand 8, single buffered']
    #allocation12 [shape = 's32[1]{0}', space=sflag, size = 0x4, scoped, tag = 'scoped memory for forward.1']
    #allocation13 [shape = 'u8[512]{0}', space=vmem, size = 0x400, scoped, tag = 'input window, operand 9, single buffered']
    #allocation14 [shape = 'u8[1024]{0}', space=vmem, size = 0x400, scoped, tag = 'input window, operand 12, single buffered']
    #allocation15 [shape = 's32[1]{0}', space=sflag, size = 0x4, scoped, tag = 'scoped memory for forward.1']
    #allocation16 [shape = 'u8[512]{0}', space=vmem, size = 0x400, scoped, tag = 'input window, operand 13, single buffered']
    #allocation17 [shape = 'u8[512]{0}', space=vmem, size = 0x400, scoped, tag = 'input window, operand 14, single buffered']
    #allocation18 [shape = 's32[1]{0}', space=sflag, size = 0x4, scoped, tag = 'scoped memory for forward.1']
    #allocation19 [shape = 'u8[4096]{0}', space=vmem, size = 0x1000, scoped, tag = 'input window, operand 17, single buffered']
    #allocation20 [shape = 'u8[4096]{0}', space=vmem, size = 0x1000, scoped, tag = 'input window, operand 18, single buffered']
    #allocation21 [shape = 's32[1]{0}', space=sflag, size = 0x4, scoped, tag = 'scoped memory for forward.1']
    #allocation22 [shape = 'u8[2048]{0}', space=vmem, size = 0x800, scoped, tag = 'input window, operand 19, single buffered']
    #allocation23 [shape = 'u8[512]{0}', space=vmem, size = 0x400, scoped, tag = 'input window, operand 21, single buffered']
    #allocation24 [shape = 's32[1]{0}', space=sflag, size = 0x4, scoped, tag = 'scoped memory for forward.1']
    #allocation25 [shape = 'u8[512]{0}', space=vmem, size = 0x400, scoped, tag = 'input window, operand 22, single buffered']
    #allocation26 [shape = 'u8[512]{0}', space=vmem, size = 0x400, scoped, tag = 'input window, operand 23, single buffered']
    #allocation27 [shape = 's32[1]{0}', space=sflag, size = 0x4, scoped, tag = 'scoped memory for forward.1']
    #allocation28 [shape = 'u8[512]{0}', space=vmem, size = 0x400, scoped, tag = 'input window, operand 24, single buffered']
    %96 = vsyncpa [#allocation4], 0
    %97 = vsyncpa [#allocation6], 0
    %98 = vsyncpa [#allocation9], 0
    %99 = vsyncpa [#allocation12], 0
    %100 = vsyncpa [#allocation15], 0
    %101 = vsyncpa [#allocation18], 0
    %102 = vsyncpa [#allocation21], 0
    %103 = vsyncpa [#allocation24], 0
    %104 = vsyncpa [#allocation27], 0
    // Predicated region
    $region2: #{forward.1} parent=1 // pred_check
      _
    $region3: #{forward.1} parent=1 // pred_check_branch
      %106 = sbr.rel (0) target = $region5
    $region4: #{forward.1} parent=1 // pred_region
      %s108 = ssub.s32 128, 128
      %109 = vsyncadd [#allocation4], %s108
      %s111 = sshll.u32 [#allocation3], 4
      %s112 = int_to_ptr.vmem [resolvable:$true] %s111
      %114 = dma.hbm_to_vmem [thread:$0]  %s1, 128, %s112, [#allocation4]
    $region5: #{forward.1} parent=1 // pred_fallthru
      _
    // Predicated region
    $region6: #{forward.1} parent=1 // pred_check
      _
    $region7: #{forward.1} parent=1 // pred_check_branch
      %116 = sbr.rel (0) target = $region9
    $region8: #{forward.1} parent=1 // pred_region
      %s118 = ssub.s32 128, 128
      %119 = vsyncadd [#allocation6], %s118
      %s121 = sshll.u32 [#allocation5], 4
      %s122 = int_to_ptr.vmem [resolvable:$true] %s121
      %124 = dma.hbm_to_vmem [thread:$0]  %s3, 128, %s122, [#allocation6]
    $region9: #{forward.1} parent=1 // pred_fallthru
      _
    // Predicated region
    $region10: #{forward.1} parent=1 // pred_check
      _
    $region11: #{forward.1} parent=1 // pred_check_branch
      %126 = sbr.rel (0) target = $region13
    $region12: #{forward.1} parent=1 // pred_region
      %s128 = ssub.s32 128, 128
      %129 = vsyncadd [#allocation6], %s128
      %s131 = sshll.u32 [#allocation7], 4
      %s132 = int_to_ptr.vmem [resolvable:$true] %s131
      %134 = dma.hbm_to_vmem [thread:$0]  %s5, 128, %s132, [#allocation6]
    $region13: #{forward.1} parent=1 // pred_fallthru
      _
    // Predicated region
    $region14: #{forward.1} parent=1 // pred_check
      _
    $region15: #{forward.1} parent=1 // pred_check_branch
      %136 = sbr.rel (0) target = $region17
    $region16: #{forward.1} parent=1 // pred_region
      _
    $region17: #{forward.1} parent=1 // pred_fallthru
      _
    // Predicated region
    $region18: #{forward.1} parent=1 // pred_check
      _
    $region19: #{forward.1} parent=1 // pred_check_branch
      %138 = sbr.rel (0) target = $region21
    $region20: #{forward.1} parent=1 // pred_region
      _
    $region21: #{forward.1} parent=1 // pred_fallthru
      _
    // Predicated region
    $region22: #{forward.1} parent=1 // pred_check
      _
    $region23: #{forward.1} parent=1 // pred_check_branch
      %140 = sbr.rel (0) target = $region25
    $region24: #{forward.1} parent=1 // pred_region
      _
    $region25: #{forward.1} parent=1 // pred_fallthru
      _
    // Predicated region
    $region26: #{forward.1} parent=1 // pred_check
      _
    $region27: #{forward.1} parent=1 // pred_check_branch
      %142 = sbr.rel (0) target = $region29
    $region28: #{forward.1} parent=1 // pred_region
      %s144 = ssub.s32 64, 64
      %145 = vsyncadd [#allocation9], %s144
      %s147 = sshll.u32 [#allocation8], 4
      %s148 = int_to_ptr.vmem [resolvable:$true] %s147
      %150 = dma.hbm_to_vmem [thread:$0]  %s13, 64, %s148, [#allocation9]
    $region29: #{forward.1} parent=1 // pred_fallthru
      _
    // Predicated region
    $region30: #{forward.1} parent=1 // pred_check
      _
    $region31: #{forward.1} parent=1 // pred_check_branch
      %152 = sbr.rel (0) target = $region33
    $region32: #{forward.1} parent=1 // pred_region
      %s154 = ssub.s32 32, 32
      %155 = vsyncadd [#allocation9], %s154
      %s157 = sshll.u32 [#allocation10], 4
      %s158 = int_to_ptr.vmem [resolvable:$true] %s157
      %160 = dma.hbm_to_vmem [thread:$0]  %s15, 32, %s158, [#allocation9]
    $region33: #{forward.1} parent=1 // pred_fallthru
      _
    // Predicated region
    $region34: #{forward.1} parent=1 // pred_check
      _
    $region35: #{forward.1} parent=1 // pred_check_branch
      %162 = sbr.rel (0) target = $region37
    $region36: #{forward.1} parent=1 // pred_region
      %s164 = ssub.s32 16, 16
      %165 = vsyncadd [#allocation12], %s164
      %s167 = sshll.u32 [#allocation11], 4
      %s168 = int_to_ptr.vmem [resolvable:$true] %s167
      %170 = dma.hbm_to_vmem [thread:$0]  %s17, 16, %s168, [#allocation12]
    $region37: #{forward.1} parent=1 // pred_fallthru
      _
    // Predicated region
    $region38: #{forward.1} parent=1 // pred_check
      _
    $region39: #{forward.1} parent=1 // pred_check_branch
      %172 = sbr.rel (0) target = $region41
    $region40: #{forward.1} parent=1 // pred_region
      %s174 = ssub.s32 16, 16
      %175 = vsyncadd [#allocation12], %s174
      %s177 = sshll.u32 [#allocation13], 4
      %s178 = int_to_ptr.vmem [resolvable:$true] %s177
      %180 = dma.hbm_to_vmem [thread:$0]  %s19, 16, %s178, [#allocation12]
    $region41: #{forward.1} parent=1 // pred_fallthru
      _
    // Predicated region
    $region42: #{forward.1} parent=1 // pred_check
      _
    $region43: #{forward.1} parent=1 // pred_check_branch
      %182 = sbr.rel (0) target = $region45
    $region44: #{forward.1} parent=1 // pred_region
      _
    $region45: #{forward.1} parent=1 // pred_fallthru
      _
    // Predicated region
    $region46: #{forward.1} parent=1 // pred_check
      _
    $region47: #{forward.1} parent=1 // pred_check_branch
      %184 = sbr.rel (0) target = $region49
    $region48: #{forward.1} parent=1 // pred_region
      _
    $region49: #{forward.1} parent=1 // pred_fallthru
      _
    // Predicated region
    $region50: #{forward.1} parent=1 // pred_check
      _
    $region51: #{forward.1} parent=1 // pred_check_branch
      %186 = sbr.rel (0) target = $region53
    $region52: #{forward.1} parent=1 // pred_region
      %s188 = ssub.s32 32, 32
      %189 = vsyncadd [#allocation15], %s188
      %s191 = sshll.u32 [#allocation14], 4
      %s192 = int_to_ptr.vmem [resolvable:$true] %s191
      %194 = dma.hbm_to_vmem [thread:$0]  %s25, 32, %s192, [#allocation15]
    $region53: #{forward.1} parent=1 // pred_fallthru
      _
    // Predicated region
    $region54: #{forward.1} parent=1 // pred_check
      _
    $region55: #{forward.1} parent=1 // pred_check_branch
      %196 = sbr.rel (0) target = $region57
    $region56: #{forward.1} parent=1 // pred_region
      %s198 = ssub.s32 16, 16
      %199 = vsyncadd [#allocation15], %s198
      %s201 = sshll.u32 [#allocation16], 4
      %s202 = int_to_ptr.vmem [resolvable:$true] %s201
      %204 = dma.hbm_to_vmem [thread:$0]  %s27, 16, %s202, [#allocation15]
    $region57: #{forward.1} parent=1 // pred_fallthru
      _
    // Predicated region
    $region58: #{forward.1} parent=1 // pred_check
      _
    $region59: #{forward.1} parent=1 // pred_check_branch
      %206 = sbr.rel (0) target = $region61
    $region60: #{forward.1} parent=1 // pred_region
      %s208 = ssub.s32 16, 16
      %209 = vsyncadd [#allocation18], %s208
      %s211 = sshll.u32 [#allocation17], 4
      %s212 = int_to_ptr.vmem [resolvable:$true] %s211
      %214 = dma.hbm_to_vmem [thread:$0]  %s29, 16, %s212, [#allocation18]
    $region61: #{forward.1} parent=1 // pred_fallthru
      _
    // Predicated region
    $region62: #{forward.1} parent=1 // pred_check
      _
    $region63: #{forward.1} parent=1 // pred_check_branch
      %216 = sbr.rel (0) target = $region65
    $region64: #{forward.1} parent=1 // pred_region
      _
    $region65: #{forward.1} parent=1 // pred_fallthru
      _
    // Predicated region
    $region66: #{forward.1} parent=1 // pred_check
      _
    $region67: #{forward.1} parent=1 // pred_check_branch
      %218 = sbr.rel (0) target = $region69
    $region68: #{forward.1} parent=1 // pred_region
      _
    $region69: #{forward.1} parent=1 // pred_fallthru
      _
    // Predicated region
    $region70: #{forward.1} parent=1 // pred_check
      _
    $region71: #{forward.1} parent=1 // pred_check_branch
      %220 = sbr.rel (0) target = $region73
    $region72: #{forward.1} parent=1 // pred_region
      %s222 = ssub.s32 128, 128
      %223 = vsyncadd [#allocation18], %s222
      %s225 = sshll.u32 [#allocation19], 4
      %s226 = int_to_ptr.vmem [resolvable:$true] %s225
      %228 = dma.hbm_to_vmem [thread:$0]  %s35, 128, %s226, [#allocation18]
    $region73: #{forward.1} parent=1 // pred_fallthru
      _
    // Predicated region
    $region74: #{forward.1} parent=1 // pred_check
      _
    $region75: #{forward.1} parent=1 // pred_check_branch
      %230 = sbr.rel (0) target = $region77
    $region76: #{forward.1} parent=1 // pred_region
      %s232 = ssub.s32 128, 128
      %233 = vsyncadd [#allocation21], %s232
      %s235 = sshll.u32 [#allocation20], 4
      %s236 = int_to_ptr.vmem [resolvable:$true] %s235
      %238 = dma.hbm_to_vmem [thread:$0]  %s37, 128, %s236, [#allocation21]
    $region77: #{forward.1} parent=1 // pred_fallthru
      _
    // Predicated region
    $region78: #{forward.1} parent=1 // pred_check
      _
    $region79: #{forward.1} parent=1 // pred_check_branch
      %240 = sbr.rel (0) target = $region81
    $region80: #{forward.1} parent=1 // pred_region
      %s242 = ssub.s32 64, 64
      %243 = vsyncadd [#allocation21], %s242
      %s245 = sshll.u32 [#allocation22], 4
      %s246 = int_to_ptr.vmem [resolvable:$true] %s245
      %248 = dma.hbm_to_vmem [thread:$0]  %s39, 64, %s246, [#allocation21]
    $region81: #{forward.1} parent=1 // pred_fallthru
      _
    // Predicated region
    $region82: #{forward.1} parent=1 // pred_check
      _
    $region83: #{forward.1} parent=1 // pred_check_branch
      %250 = sbr.rel (0) target = $region85
    $region84: #{forward.1} parent=1 // pred_region
      _
    $region85: #{forward.1} parent=1 // pred_fallthru
      _
    // Predicated region
    $region86: #{forward.1} parent=1 // pred_check
      _
    $region87: #{forward.1} parent=1 // pred_check_branch
      %252 = sbr.rel (0) target = $region89
    $region88: #{forward.1} parent=1 // pred_region
      %s254 = ssub.s32 16, 16
      %255 = vsyncadd [#allocation24], %s254
      %s257 = sshll.u32 [#allocation23], 4
      %s258 = int_to_ptr.vmem [resolvable:$true] %s257
      %260 = dma.hbm_to_vmem [thread:$0]  %s43, 16, %s258, [#allocation24]
    $region89: #{forward.1} parent=1 // pred_fallthru
      _
    // Predicated region
    $region90: #{forward.1} parent=1 // pred_check
      _
    $region91: #{forward.1} parent=1 // pred_check_branch
      %262 = sbr.rel (0) target = $region93
    $region92: #{forward.1} parent=1 // pred_region
      %s264 = ssub.s32 16, 16
      %265 = vsyncadd [#allocation24], %s264
      %s267 = sshll.u32 [#allocation25], 4
      %s268 = int_to_ptr.vmem [resolvable:$true] %s267
      %270 = dma.hbm_to_vmem [thread:$0]  %s45, 16, %s268, [#allocation24]
    $region93: #{forward.1} parent=1 // pred_fallthru
      _
    // Predicated region
    $region94: #{forward.1} parent=1 // pred_check
      _
    $region95: #{forward.1} parent=1 // pred_check_branch
      %272 = sbr.rel (0) target = $region97
    $region96: #{forward.1} parent=1 // pred_region
      %s274 = ssub.s32 16, 16
      %275 = vsyncadd [#allocation27], %s274
      %s277 = sshll.u32 [#allocation26], 4
      %s278 = int_to_ptr.vmem [resolvable:$true] %s277
      %280 = dma.hbm_to_vmem [thread:$0]  %s47, 16, %s278, [#allocation27]
    $region97: #{forward.1} parent=1 // pred_fallthru
      _
    // Predicated region
    $region98: #{forward.1} parent=1 // pred_check
      _
    $region99: #{forward.1} parent=1 // pred_check_branch
      %282 = sbr.rel (0) target = $region101
    $region100: #{forward.1} parent=1 // pred_region
      %s284 = ssub.s32 16, 16
      %285 = vsyncadd [#allocation27], %s284
      %s287 = sshll.u32 [#allocation28], 4
      %s288 = int_to_ptr.vmem [resolvable:$true] %s287
      %290 = dma.hbm_to_vmem [thread:$0]  %s49, 16, %s288, [#allocation27]
    $region101: #{forward.1} parent=1 // pred_fallthru
      _
    // Predicated region
    $region102: #{forward.1} parent=1 // pred_check
      _
    $region103: #{forward.1} parent=1 // pred_check_branch
      %292 = sbr.rel (0) target = $region105
    $region104: #{forward.1} parent=1 // pred_region
      _
    $region105: #{forward.1} parent=1 // pred_fallthru
      _
    // Predicated region
    $region106: #{forward.1} parent=1 // pred_check
      _
    $region107: #{forward.1} parent=1 // pred_check_branch
      %294 = sbr.rel (0) target = $region109
    $region108: #{forward.1} parent=1 // pred_region
      _
    $region109: #{forward.1} parent=1 // pred_fallthru
      _
    // Predicated region
    $region110: #{forward.1} parent=1 // pred_check
      _
    $region111: #{forward.1} parent=1 // pred_check_branch
      %296 = sbr.rel (0) target = $region113
    $region112: #{forward.1} parent=1 // pred_region
      _
    $region113: #{forward.1} parent=1 // pred_fallthru
      _
    // Predicated region
    $region114: #{forward.1} parent=1 // pred_check
      _
    $region115: #{forward.1} parent=1 // pred_check_branch
      %298 = sbr.rel (0) target = $region117
    $region116: #{forward.1} parent=1 // pred_region
      _
    $region117: #{forward.1} parent=1 // pred_fallthru
      _
    // Predicated region
    $region118: #{forward.1} parent=1 // pred_check
      _
    $region119: #{forward.1} parent=1 // pred_check_branch
      %300 = sbr.rel (0) target = $region121
    $region120: #{forward.1} parent=1 // pred_region
      _
    $region121: #{forward.1} parent=1 // pred_fallthru
      _
    // Predicated region
    $region122: #{forward.1} parent=1 // pred_check
      _
    $region123: #{forward.1} parent=1 // pred_check_branch
      %302 = sbr.rel (0) target = $region125
    $region124: #{forward.1} parent=1 // pred_region
      _
    $region125: #{forward.1} parent=1 // pred_fallthru
      _
    // Predicated region
    $region126: #{forward.1} parent=1 // pred_check
      _
    $region127: #{forward.1} parent=1 // pred_check_branch
      %304 = sbr.rel (0) target = $region129
    $region128: #{forward.1} parent=1 // pred_region
      _
    $region129: #{forward.1} parent=1 // pred_fallthru
      _
    // Predicated region
    $region130: #{forward.1} parent=1 // pred_check
      _
    $region131: #{forward.1} parent=1 // pred_check_branch
      %306 = sbr.rel (0) target = $region133
    $region132: #{forward.1} parent=1 // pred_region
      _
    $region133: #{forward.1} parent=1 // pred_fallthru
      _
    // Predicated region
    $region134: #{forward.1} parent=1 // pred_check
      _
    $region135: #{forward.1} parent=1 // pred_check_branch
      %308 = sbr.rel (0) target = $region137
    $region136: #{forward.1} parent=1 // pred_region
      _
    $region137: #{forward.1} parent=1 // pred_fallthru
      _
    // Predicated region
    $region138: #{forward.1} parent=1 // pred_check
      _
    $region139: #{forward.1} parent=1 // pred_check_branch
      %310 = sbr.rel (0) target = $region141
    $region140: #{forward.1} parent=1 // pred_region
      _
    $region141: #{forward.1} parent=1 // pred_fallthru
      _
    // Predicated region
    $region142: #{forward.1} parent=1 // pred_check
      _
    $region143: #{forward.1} parent=1 // pred_check_branch
      %312 = sbr.rel (0) target = $region145
    $region144: #{forward.1} parent=1 // pred_region
      _
    $region145: #{forward.1} parent=1 // pred_fallthru
      _
    // Predicated region
    $region146: #{forward.1} parent=1 // pred_check
      _
    $region147: #{forward.1} parent=1 // pred_check_branch
      %314 = sbr.rel (0) target = $region149
    $region148: #{forward.1} parent=1 // pred_region
      _
    $region149: #{forward.1} parent=1 // pred_fallthru
      _
    // Predicated region
    $region150: #{forward.1} parent=1 // pred_check
      _
    $region151: #{forward.1} parent=1 // pred_check_branch
      %316 = sbr.rel (0) target = $region153
    $region152: #{forward.1} parent=1 // pred_region
      _
    $region153: #{forward.1} parent=1 // pred_fallthru
      _
    // Predicated region
    $region154: #{forward.1} parent=1 // pred_check
      _
    $region155: #{forward.1} parent=1 // pred_check_branch
      %318 = sbr.rel (0) target = $region157
    $region156: #{forward.1} parent=1 // pred_region
      _
    $region157: #{forward.1} parent=1 // pred_fallthru
      _
    // Predicated region
    $region158: #{forward.1} parent=1 // pred_check
      _
    $region159: #{forward.1} parent=1 // pred_check_branch
      %320 = sbr.rel (0) target = $region161
    $region160: #{forward.1} parent=1 // pred_region
      _
    $region161: #{forward.1} parent=1 // pred_fallthru
      _
    // Predicated region
    $region162: #{forward.1} parent=1 // pred_check
      _
    $region163: #{forward.1} parent=1 // pred_check_branch
      %322 = sbr.rel (0) target = $region165
    $region164: #{forward.1} parent=1 // pred_region
      _
    $region165: #{forward.1} parent=1 // pred_fallthru
      _
    // Predicated region
    $region166: #{forward.1} parent=1 // pred_check
      _
    $region167: #{forward.1} parent=1 // pred_check_branch
      %324 = sbr.rel (0) target = $region169
    $region168: #{forward.1} parent=1 // pred_region
      _
    $region169: #{forward.1} parent=1 // pred_fallthru
      _
    // Predicated region
    $region170: #{forward.1} parent=1 // pred_check
      _
    $region171: #{forward.1} parent=1 // pred_check_branch
      %326 = sbr.rel (0) target = $region173
    $region172: #{forward.1} parent=1 // pred_region
      _
    $region173: #{forward.1} parent=1 // pred_fallthru
      _
    // Predicated region
    $region174: #{forward.1} parent=1 // pred_check
      _
    $region175: #{forward.1} parent=1 // pred_check_branch
      %328 = sbr.rel (0) target = $region177
    $region176: #{forward.1} parent=1 // pred_region
      _
    $region177: #{forward.1} parent=1 // pred_fallthru
      _
    // Predicated region
    $region178: #{forward.1} parent=1 // pred_check
      _
    $region179: #{forward.1} parent=1 // pred_check_branch
      %330 = sbr.rel (0) target = $region181
    $region180: #{forward.1} parent=1 // pred_region
      %331 = dma.done [#allocation4], 128
    $region181: #{forward.1} parent=1 // pred_fallthru
      _
    // Predicated region
    $region182: #{forward.1} parent=1 // pred_check
      _
    $region183: #{forward.1} parent=1 // pred_check_branch
      %333 = sbr.rel (0) target = $region185
    $region184: #{forward.1} parent=1 // pred_region
      %334 = dma.done [#allocation6], 128
    $region185: #{forward.1} parent=1 // pred_fallthru
      _
    // Predicated region
    $region186: #{forward.1} parent=1 // pred_check
      _
    $region187: #{forward.1} parent=1 // pred_check_branch
      %336 = sbr.rel (0) target = $region189
    $region188: #{forward.1} parent=1 // pred_region
      %337 = dma.done [#allocation6], 128
    $region189: #{forward.1} parent=1 // pred_fallthru
      _
    // Predicated region
    $region190: #{forward.1} parent=1 // pred_check
      _
    $region191: #{forward.1} parent=1 // pred_check_branch
      %339 = sbr.rel (0) target = $region193
    $region192: #{forward.1} parent=1 // pred_region
      %340 = dma.done [#allocation9], 64
    $region193: #{forward.1} parent=1 // pred_fallthru
      _
    // Predicated region
    $region194: #{forward.1} parent=1 // pred_check
      _
    $region195: #{forward.1} parent=1 // pred_check_branch
      %342 = sbr.rel (0) target = $region197
    $region196: #{forward.1} parent=1 // pred_region
      %343 = dma.done [#allocation9], 32
    $region197: #{forward.1} parent=1 // pred_fallthru
      _
    // Predicated region
    $region198: #{forward.1} parent=1 // pred_check
      _
    $region199: #{forward.1} parent=1 // pred_check_branch
      %345 = sbr.rel (0) target = $region201
    $region200: #{forward.1} parent=1 // pred_region
      %346 = dma.done [#allocation12], 16
    $region201: #{forward.1} parent=1 // pred_fallthru
      _
    // Predicated region
    $region202: #{forward.1} parent=1 // pred_check
      _
    $region203: #{forward.1} parent=1 // pred_check_branch
      %348 = sbr.rel (0) target = $region205
    $region204: #{forward.1} parent=1 // pred_region
      %349 = dma.done [#allocation12], 16
    $region205: #{forward.1} parent=1 // pred_fallthru
      _
    // Predicated region
    $region206: #{forward.1} parent=1 // pred_check
      _
    $region207: #{forward.1} parent=1 // pred_check_branch
      %351 = sbr.rel (0) target = $region209
    $region208: #{forward.1} parent=1 // pred_region
      %352 = dma.done [#allocation15], 32
    $region209: #{forward.1} parent=1 // pred_fallthru
      _
    // Predicated region
    $region210: #{forward.1} parent=1 // pred_check
      _
    $region211: #{forward.1} parent=1 // pred_check_branch
      %354 = sbr.rel (0) target = $region213
    $region212: #{forward.1} parent=1 // pred_region
      %355 = dma.done [#allocation15], 16
    $region213: #{forward.1} parent=1 // pred_fallthru
      _
    // Predicated region
    $region214: #{forward.1} parent=1 // pred_check
      _
    $region215: #{forward.1} parent=1 // pred_check_branch
      %357 = sbr.rel (0) target = $region217
    $region216: #{forward.1} parent=1 // pred_region
      %358 = dma.done [#allocation18], 16
    $region217: #{forward.1} parent=1 // pred_fallthru
      _
    // Predicated region
    $region218: #{forward.1} parent=1 // pred_check
      _
    $region219: #{forward.1} parent=1 // pred_check_branch
      %360 = sbr.rel (0) target = $region221
    $region220: #{forward.1} parent=1 // pred_region
      %361 = dma.done [#allocation18], 128
    $region221: #{forward.1} parent=1 // pred_fallthru
      _
    // Predicated region
    $region222: #{forward.1} parent=1 // pred_check
      _
    $region223: #{forward.1} parent=1 // pred_check_branch
      %363 = sbr.rel (0) target = $region225
    $region224: #{forward.1} parent=1 // pred_region
      %364 = dma.done [#allocation21], 128
    $region225: #{forward.1} parent=1 // pred_fallthru
      _
    // Predicated region
    $region226: #{forward.1} parent=1 // pred_check
      _
    $region227: #{forward.1} parent=1 // pred_check_branch
      %366 = sbr.rel (0) target = $region229
    $region228: #{forward.1} parent=1 // pred_region
      %367 = dma.done [#allocation21], 64
    $region229: #{forward.1} parent=1 // pred_fallthru
      _
    // Predicated region
    $region230: #{forward.1} parent=1 // pred_check
      _
    $region231: #{forward.1} parent=1 // pred_check_branch
      %369 = sbr.rel (0) target = $region233
    $region232: #{forward.1} parent=1 // pred_region
      %370 = dma.done [#allocation24], 16
    $region233: #{forward.1} parent=1 // pred_fallthru
      _
    // Predicated region
    $region234: #{forward.1} parent=1 // pred_check
      _
    $region235: #{forward.1} parent=1 // pred_check_branch
      %372 = sbr.rel (0) target = $region237
    $region236: #{forward.1} parent=1 // pred_region
      %373 = dma.done [#allocation24], 16
    $region237: #{forward.1} parent=1 // pred_fallthru
      _
    // Predicated region
    $region238: #{forward.1} parent=1 // pred_check
      _
    $region239: #{forward.1} parent=1 // pred_check_branch
      %375 = sbr.rel (0) target = $region241
    $region240: #{forward.1} parent=1 // pred_region
      %376 = dma.done [#allocation27], 16
    $region241: #{forward.1} parent=1 // pred_fallthru
      _
    // Predicated region
    $region242: #{forward.1} parent=1 // pred_check
      _
    $region243: #{forward.1} parent=1 // pred_check_branch
      %378 = sbr.rel (0) target = $region245
    $region244: #{forward.1} parent=1 // pred_region
      %379 = dma.done [#allocation27], 16
    $region245: #{forward.1} parent=1 // pred_fallthru
      _
    %v380 = vld [vmem:[%s9] sm:$0x1]
    %v381 = vld [vmem:[%s11] sm:$0x1]
    %v382 = vld [vmem:[#allocation8] sm:$0x7]
    %v383 = vld [vmem:[#allocation10] sm:$0x3]
    %v384 = vld [vmem:[#allocation11] sm:$0x1]
    %v385 = vld [vmem:[#allocation13] sm:$0x1]
    %v386 = vld [vmem:[%s21] sm:$0x1]
    %v387 = vld [vmem:[%s23] sm:$0x1]
    %v388 = vld [vmem:[#allocation14] sm:$0x3]
    %v389 = vld [vmem:[#allocation16] sm:$0x1]
    %v390 = vld [vmem:[#allocation17] sm:$0x1]
    %v391 = vld [vmem:[%s31] sm:$0x1]
    %v392 = vld [vmem:[%s33] sm:$0x1]
    %v393 = vld [vmem:[#allocation19] sm:$0xff]
    %v394 = vld [vmem:[#allocation20] sm:$0xff]
    %v395 = vld [vmem:[#allocation22] sm:$0xf]
    %v396 = vld [vmem:[%s41] sm:$0x3]
    %v397 = vld [vmem:[#allocation23] sm:$0x1]
    %v398 = vld [vmem:[#allocation25] sm:$0x1]
    %v399 = vld [vmem:[#allocation26] sm:$0x1]
    %v400 = vld [vmem:[#allocation28] sm:$0x1]
    %v401 = vld [vmem:[%s51] sm:$0x1]
    %v402 = vld [vmem:[%s53] sm:$0x1]
    %v403 = vld [vmem:[%s55] sm:$0x1]
    %v404 = vld [vmem:[%s57] sm:$0x1]
    %v405 = vld [vmem:[%s59] sm:$0xff]
    %v406 = vld [vmem:[%s59 + $0x8] sm:$0xff]
    %v407 = vld [vmem:[%s59 + $0x10] sm:$0xff]
    %v408 = vld [vmem:[%s61] sm:$0x1]
    %v409 = vld [vmem:[%s63] sm:$0xff]
    %v410 = vld [vmem:[%s63 + $0x8] sm:$0xff]
    %v411 = vld [vmem:[%s65] sm:$0x1]
    %v412 = vld [vmem:[%s67] sm:$0x1]
    %v413 = vld [vmem:[%s69] sm:$0x1]
    %v414 = vld [vmem:[%s71] sm:$0xff]
    %v415 = vld [vmem:[%s73] sm:$0xff]
    %v416 = vld [vmem:[%s75] sm:$0x1]
    %v417 = vld [vmem:[%s77] sm:$0xff]
    %v418 = vld [vmem:[#allocation2] sm:$0x1]
    %v419 = vld [vmem:[%s81] sm:$0xff]
    %v420 = vld [vmem:[%s81 + $0x8] sm:$0xff]
    %v421 = vld [vmem:[%s83] sm:$0x1]
    %v422 = vld [vmem:[%s85] sm:$0xff]
    %v423 = vld [vmem:[%s85 + $0x8] sm:$0xff]
    %v424 = vld [vmem:[%s87] sm:$0x1]
    %v425 = vld [vmem:[#allocation3] sm:$0xff]
    %v426 = vld [vmem:[#allocation5] sm:$0xff]
    %v427 = vld [vmem:[#allocation7] sm:$0xff]
    %v428 = vld [vmem:[%s7] sm:$0xff]
    %v430 = vlaneseq
    %v431 = vshrl.u32 %v430, 7
    %v432 = vsub.s32 0, %v431
    %v433 = vrot.slane %v424, %v432
    %vm435 = vcmask 130048
    %v437 = vsel %vm435, %v425, 0
    %439 = vmatprep.subr.mxu0 0.0
    %440 = vmatpush1.msra.mxu0 %v422
    %441 = vmatprep.subr.mxu0 0.0
    %442 = vmatpush1.msra.mxu0 %v423
    %443 = vmatprep.subr.mxu0 0.0
    %444 = vmatpush1.msra.mxu0 0.0
    %445 = vmatprep.subr.mxu0 0.0
    %446 = vmatpush1.msra.mxu0 0.0
    %447 = vmatprep.subr.mxu0 0.0
    %448 = vmatpush1.msra.mxu0 0.0
    %449 = vmatprep.subr.mxu0 0.0
    %450 = vmatpush1.msra.mxu0 0.0
    %451 = vmatprep.subr.mxu0 0.0
    %452 = vmatpush1.msra.mxu0 0.0
    %453 = vmatprep.subr.mxu0 0.0
    %454 = vmatpush1.msra.mxu0 0.0
    %455 = vmatprep.subr.mxu0 0.0
    %456 = vmatpush1.msra.mxu0 0.0
    %457 = vmatprep.subr.mxu0 0.0
    %458 = vmatpush1.msra.mxu0 0.0
    %459 = vmatprep.subr.mxu0 0.0
    %460 = vmatpush1.msra.mxu0 0.0
    %461 = vmatprep.subr.mxu0 0.0
    %462 = vmatpush1.msra.mxu0 0.0
    %463 = vmatprep.subr.mxu0 0.0
    %464 = vmatpush1.msra.mxu0 0.0
    %465 = vmatprep.subr.mxu0 0.0
    %466 = vmatpush1.msra.mxu0 0.0
    %467 = vmatprep.subr.mxu0 0.0
    %468 = vmatpush1.msra.mxu0 0.0
    %469 = vmatprep.subr.mxu0 0.0
    %470 = vmatpush1.msra.mxu0 0.0
    %471 = vmatprep.subr.mxu0 0.0
    %472 = vmatpush1.msra.mxu0 0.0
    %473 = vmatprep.subr.mxu0 0.0
    %474 = vmatpush1.msra.mxu0 0.0
    %475 = vmatprep.subr.mxu0 0.0
    %476 = vmatpush1.msra.mxu0 0.0
    %477 = vmatprep.subr.mxu0 0.0
    %478 = vmatpush1.msra.mxu0 0.0
    %479 = vmatprep.subr.mxu0 0.0
    %480 = vmatpush1.msra.mxu0 0.0
    %481 = vmatprep.subr.mxu0 0.0
    %482 = vmatpush1.msra.mxu0 0.0
    %483 = vmatprep.subr.mxu0 0.0
    %484 = vmatpush1.msra.mxu0 0.0
    %485 = vmatprep.subr.mxu0 0.0
    %486 = vmatpush1.msra.mxu0 0.0
    %487 = vmatprep.subr.mxu0 0.0
    %488 = vmatpush1.msra.mxu0 0.0
    %489 = vmatprep.subr.mxu0 0.0
    %490 = vmatpush1.msra.mxu0 0.0
    %491 = vmatprep.subr.mxu0 0.0
    %492 = vmatpush1.msra.mxu0 0.0
    %493 = vmatprep.subr.mxu0 0.0
    %494 = vmatpush1.msra.mxu0 0.0
    %495 = vmatprep.subr.mxu0 0.0
    %496 = vmatpush1.msra.mxu0 0.0
    %497 = vmatprep.subr.mxu0 0.0
    %498 = vmatpush1.msra.mxu0 0.0
    %499 = vmatprep.subr.mxu0 0.0
    %500 = vmatpush1.msra.mxu0 0.0
    %501 = vmatprep.subr.mxu0 0.0
    %502 = vmatpush1.msra.mxu0 0.0
    %503 = vmatprep.mubr.f32.mxu0 0.0
    %504 = vmatmul.mubr.f32.gmra.mrb[0].mxu0 %v437
    %v505 = vpop.f32.mrb[0].mxu0
    %v506 = vadd.f32 %v433, %v505
    %v507 = vpop.f32.mrb[0].mxu0
    %508 = vdwg.mxu0
    %v510 = vlaneseq
    %v511 = vshrl.u32 %v510, 7
    %v512 = vsub.s32 0, %v511
    %v513 = vrot.slane %v421, %v512
    %v516 = vsel %vm435, %v426, 0
    %518 = vmatprep.subr.mxu0 0.0
    %519 = vmatpush1.msra.mxu0 %v419
    %520 = vmatprep.subr.mxu0 0.0
    %521 = vmatpush1.msra.mxu0 %v420
    %522 = vmatprep.subr.mxu0 0.0
    %523 = vmatpush1.msra.mxu0 0.0
    %524 = vmatprep.subr.mxu0 0.0
    %525 = vmatpush1.msra.mxu0 0.0
    %526 = vmatprep.subr.mxu0 0.0
    %527 = vmatpush1.msra.mxu0 0.0
    %528 = vmatprep.subr.mxu0 0.0
    %529 = vmatpush1.msra.mxu0 0.0
    %530 = vmatprep.subr.mxu0 0.0
    %531 = vmatpush1.msra.mxu0 0.0
    %532 = vmatprep.subr.mxu0 0.0
    %533 = vmatpush1.msra.mxu0 0.0
    %534 = vmatprep.subr.mxu0 0.0
    %535 = vmatpush1.msra.mxu0 0.0
    %536 = vmatprep.subr.mxu0 0.0
    %537 = vmatpush1.msra.mxu0 0.0
    %538 = vmatprep.subr.mxu0 0.0
    %539 = vmatpush1.msra.mxu0 0.0
    %540 = vmatprep.subr.mxu0 0.0
    %541 = vmatpush1.msra.mxu0 0.0
    %542 = vmatprep.subr.mxu0 0.0
    %543 = vmatpush1.msra.mxu0 0.0
    %544 = vmatprep.subr.mxu0 0.0
    %545 = vmatpush1.msra.mxu0 0.0
    %546 = vmatprep.subr.mxu0 0.0
    %547 = vmatpush1.msra.mxu0 0.0
    %548 = vmatprep.subr.mxu0 0.0
    %549 = vmatpush1.msra.mxu0 0.0
    %550 = vmatprep.subr.mxu0 0.0
    %551 = vmatpush1.msra.mxu0 0.0
    %552 = vmatprep.subr.mxu0 0.0
    %553 = vmatpush1.msra.mxu0 0.0
    %554 = vmatprep.subr.mxu0 0.0
    %555 = vmatpush1.msra.mxu0 0.0
    %556 = vmatprep.subr.mxu0 0.0
    %557 = vmatpush1.msra.mxu0 0.0
    %558 = vmatprep.subr.mxu0 0.0
    %559 = vmatpush1.msra.mxu0 0.0
    %560 = vmatprep.subr.mxu0 0.0
    %561 = vmatpush1.msra.mxu0 0.0
    %562 = vmatprep.subr.mxu0 0.0
    %563 = vmatpush1.msra.mxu0 0.0
    %564 = vmatprep.subr.mxu0 0.0
    %565 = vmatpush1.msra.mxu0 0.0
    %566 = vmatprep.subr.mxu0 0.0
    %567 = vmatpush1.msra.mxu0 0.0
    %568 = vmatprep.subr.mxu0 0.0
    %569 = vmatpush1.msra.mxu0 0.0
    %570 = vmatprep.subr.mxu0 0.0
    %571 = vmatpush1.msra.mxu0 0.0
    %572 = vmatprep.subr.mxu0 0.0
    %573 = vmatpush1.msra.mxu0 0.0
    %574 = vmatprep.subr.mxu0 0.0
    %575 = vmatpush1.msra.mxu0 0.0
    %576 = vmatprep.subr.mxu0 0.0
    %577 = vmatpush1.msra.mxu0 0.0
    %578 = vmatprep.subr.mxu0 0.0
    %579 = vmatpush1.msra.mxu0 0.0
    %580 = vmatprep.subr.mxu0 0.0
    %581 = vmatpush1.msra.mxu0 0.0
    %582 = vmatprep.mubr.f32.mxu0 0.0
    %583 = vmatmul.mubr.f32.gmra.mrb[0].mxu0 %v516
    %v584 = vpop.f32.mrb[0].mxu0
    %v585 = vadd.f32 %v513, %v584
    %v586 = vpop.f32.mrb[0].mxu0
    %587 = vdwg.mxu0
    %vm588 = vcmask 15360
    %v590 = vsel %vm588, %v585, 0
    %vm592 = vcmask 1041408
    %v594 = vsel %vm592, %v383, 0
    %596 = vmatprep.subr.mxu0 0.0
    %597 = vmatpush1.msra.mxu0 %v594
    %598 = vmatprep.subr.mxu0 0.0
    %599 = vmatpush1.msra.mxu0 0.0
    %600 = vmatprep.subr.mxu0 0.0
    %601 = vmatpush1.msra.mxu0 0.0
    %602 = vmatprep.subr.mxu0 0.0
    %603 = vmatpush1.msra.mxu0 0.0
    %604 = vmatprep.subr.mxu0 0.0
    %605 = vmatpush1.msra.mxu0 0.0
    %606 = vmatprep.subr.mxu0 0.0
    %607 = vmatpush1.msra.mxu0 0.0
    %608 = vmatprep.subr.mxu0 0.0
    %609 = vmatpush1.msra.mxu0 0.0
    %610 = vmatprep.subr.mxu0 0.0
    %611 = vmatpush1.msra.mxu0 0.0
    %612 = vmatprep.subr.mxu0 0.0
    %613 = vmatpush1.msra.mxu0 0.0
    %614 = vmatprep.subr.mxu0 0.0
    %615 = vmatpush1.msra.mxu0 0.0
    %616 = vmatprep.subr.mxu0 0.0
    %617 = vmatpush1.msra.mxu0 0.0
    %618 = vmatprep.subr.mxu0 0.0
    %619 = vmatpush1.msra.mxu0 0.0
    %620 = vmatprep.subr.mxu0 0.0
    %621 = vmatpush1.msra.mxu0 0.0
    %622 = vmatprep.subr.mxu0 0.0
    %623 = vmatpush1.msra.mxu0 0.0
    %624 = vmatprep.subr.mxu0 0.0
    %625 = vmatpush1.msra.mxu0 0.0
    %626 = vmatprep.subr.mxu0 0.0
    %627 = vmatpush1.msra.mxu0 0.0
    %628 = vmatprep.subr.mxu0 0.0
    %629 = vmatpush1.msra.mxu0 0.0
    %630 = vmatprep.subr.mxu0 0.0
    %631 = vmatpush1.msra.mxu0 0.0
    %632 = vmatprep.subr.mxu0 0.0
    %633 = vmatpush1.msra.mxu0 0.0
    %634 = vmatprep.subr.mxu0 0.0
    %635 = vmatpush1.msra.mxu0 0.0
    %636 = vmatprep.subr.mxu0 0.0
    %637 = vmatpush1.msra.mxu0 0.0
    %638 = vmatprep.subr.mxu0 0.0
    %639 = vmatpush1.msra.mxu0 0.0
    %640 = vmatprep.subr.mxu0 0.0
    %641 = vmatpush1.msra.mxu0 0.0
    %642 = vmatprep.subr.mxu0 0.0
    %643 = vmatpush1.msra.mxu0 0.0
    %644 = vmatprep.subr.mxu0 0.0
    %645 = vmatpush1.msra.mxu0 0.0
    %646 = vmatprep.subr.mxu0 0.0
    %647 = vmatpush1.msra.mxu0 0.0
    %648 = vmatprep.subr.mxu0 0.0
    %649 = vmatpush1.msra.mxu0 0.0
    %650 = vmatprep.subr.mxu0 0.0
    %651 = vmatpush1.msra.mxu0 0.0
    %652 = vmatprep.subr.mxu0 0.0
    %653 = vmatpush1.msra.mxu0 0.0
    %654 = vmatprep.subr.mxu0 0.0
    %655 = vmatpush1.msra.mxu0 0.0
    %656 = vmatprep.subr.mxu0 0.0
    %657 = vmatpush1.msra.mxu0 0.0
    %658 = vmatprep.subr.mxu0 0.0
    %659 = vmatpush1.msra.mxu0 0.0
    %660 = vmatprep.mubr.f32.mxu0 0.0
    %661 = vmatmul.mubr.f32.gmra.mrb[0].mxu0 %v590
    %v662 = vpop.f32.mrb[0].mxu0
    %v663 = vadd.f32 0.0, %v662
    %v664 = vpop.f32.mrb[0].mxu0
    %665 = vdwg.mxu0
    %vm666 = vcmask 23552
    %v668 = vsel %vm666, %v506, 0
    %vm670 = vcmask 1042432
    %v672 = vsel %vm670, %v382, 0
    %674 = vmatprep.subr.mxu0 0.0
    %675 = vmatpush1.msra.mxu0 %v672
    %676 = vmatprep.subr.mxu0 0.0
    %677 = vmatpush1.msra.mxu0 0.0
    %678 = vmatprep.subr.mxu0 0.0
    %679 = vmatpush1.msra.mxu0 0.0
    %680 = vmatprep.subr.mxu0 0.0
    %681 = vmatpush1.msra.mxu0 0.0
    %682 = vmatprep.subr.mxu0 0.0
    %683 = vmatpush1.msra.mxu0 0.0
    %684 = vmatprep.subr.mxu0 0.0
    %685 = vmatpush1.msra.mxu0 0.0
    %686 = vmatprep.subr.mxu0 0.0
    %687 = vmatpush1.msra.mxu0 0.0
    %688 = vmatprep.subr.mxu0 0.0
    %689 = vmatpush1.msra.mxu0 0.0
    %690 = vmatprep.subr.mxu0 0.0
    %691 = vmatpush1.msra.mxu0 0.0
    %692 = vmatprep.subr.mxu0 0.0
    %693 = vmatpush1.msra.mxu0 0.0
    %694 = vmatprep.subr.mxu0 0.0
    %695 = vmatpush1.msra.mxu0 0.0
    %696 = vmatprep.subr.mxu0 0.0
    %697 = vmatpush1.msra.mxu0 0.0
    %698 = vmatprep.subr.mxu0 0.0
    %699 = vmatpush1.msra.mxu0 0.0
    %700 = vmatprep.subr.mxu0 0.0
    %701 = vmatpush1.msra.mxu0 0.0
    %702 = vmatprep.subr.mxu0 0.0
    %703 = vmatpush1.msra.mxu0 0.0
    %704 = vmatprep.subr.mxu0 0.0
    %705 = vmatpush1.msra.mxu0 0.0
    %706 = vmatprep.subr.mxu0 0.0
    %707 = vmatpush1.msra.mxu0 0.0
    %708 = vmatprep.subr.mxu0 0.0
    %709 = vmatpush1.msra.mxu0 0.0
    %710 = vmatprep.subr.mxu0 0.0
    %711 = vmatpush1.msra.mxu0 0.0
    %712 = vmatprep.subr.mxu0 0.0
    %713 = vmatpush1.msra.mxu0 0.0
    %714 = vmatprep.subr.mxu0 0.0
    %715 = vmatpush1.msra.mxu0 0.0
    %716 = vmatprep.subr.mxu0 0.0
    %717 = vmatpush1.msra.mxu0 0.0
    %718 = vmatprep.subr.mxu0 0.0
    %719 = vmatpush1.msra.mxu0 0.0
    %720 = vmatprep.subr.mxu0 0.0
    %721 = vmatpush1.msra.mxu0 0.0
    %722 = vmatprep.subr.mxu0 0.0
    %723 = vmatpush1.msra.mxu0 0.0
    %724 = vmatprep.subr.mxu0 0.0
    %725 = vmatpush1.msra.mxu0 0.0
    %726 = vmatprep.subr.mxu0 0.0
    %727 = vmatpush1.msra.mxu0 0.0
    %728 = vmatprep.subr.mxu0 0.0
    %729 = vmatpush1.msra.mxu0 0.0
    %730 = vmatprep.subr.mxu0 0.0
    %731 = vmatpush1.msra.mxu0 0.0
    %732 = vmatprep.subr.mxu0 0.0
    %733 = vmatpush1.msra.mxu0 0.0
    %734 = vmatprep.subr.mxu0 0.0
    %735 = vmatpush1.msra.mxu0 0.0
    %736 = vmatprep.subr.mxu0 0.0
    %737 = vmatpush1.msra.mxu0 0.0
    %738 = vmatprep.mubr.f32.mxu0 0.0
    %739 = vmatmul.mubr.f32.gmra.mrb[0].mxu0 %v668
    %v740 = vpop.f32.mrb[0].mxu0
    %v741 = vadd.f32 %v663, %v740
    %v742 = vpop.f32.mrb[0].mxu0
    %743 = vdwg.mxu0
    %745 = vset.pattern.permute.xlu0 0
    %746 = vperm.xlu0 %745, %v428
    %v747 = vpop.permute.xlu0 %746
    %v750 = vlaneseq
    %v751 = vshrl.u32 %v750, 7
    %v752 = vsub.s32 0, %v751
    %v753 = vrot.slane %v384, %v752
    %v755 = vmul.f32 %v747, %v753
    %v756 = vadd.f32 %v741, %v755
    %v758 = vlaneseq
    %v759 = vshrl.u32 %v758, 7
    %v760 = vsub.s32 0, %v759
    %v761 = vrot.slane %v385, %v760
    %v763 = vadd.f32 %v756, %v761
    %v764 = vtanh.pop %v763
    %vm765 = vcmask 64512
    %v766 = vsel %vm765, %v764, 0.0
    %v767 = vrot.slane %v766, 4
    %v768 = vadd.f32 %v766, %v767
    %v769 = vrot.slane %v768, 2
    %v770 = vadd.f32 %v768, %v769
    %v771 = vrot.slane %v770, 1
    %v772 = vadd.f32 %v770, %v771
    %v773 = vrcp.pop 8.0
    %v774 = vmul.f32 %v772, %v773
    %v775 = vsub.f32 %v764, %v774
    %v776 = vmul.f32 %v775, %v775
    %v777 = vsel %vm765, %v776, 0.0
    %v778 = vrot.slane %v777, 4
    %v779 = vadd.f32 %v777, %v778
    %v780 = vrot.slane %v779, 2
    %v781 = vadd.f32 %v779, %v780
    %v782 = vrot.slane %v781, 1
    %v783 = vadd.f32 %v781, %v782
    %v784 = vmul.f32 %v783, %v773
    %v785 = vadd.f32 %v784, 1e-05
    %v786 = vrsqrt.pop %v785
    %v787 = vmul.f32 %v775, %v786
    %v789 = vlaneseq
    %v790 = vshrl.u32 %v789, 7
    %v791 = vsub.s32 0, %v790
    %v792 = vrot.slane %v380, %v791
    %v794 = vmul.f32 %v787, %v792
    %v796 = vlaneseq
    %v797 = vshrl.u32 %v796, 7
    %v798 = vsub.s32 0, %v797
    %v799 = vrot.slane %v381, %v798
    %v801 = vadd.f32 %v794, %v799
    %802 = vset.pattern.permute.xlu0 1
    %803 = vperm.xlu0 %802, %v428
    %v804 = vpop.permute.xlu0 %803
    %v807 = vlaneseq
    %v808 = vshrl.u32 %v807, 7
    %v809 = vsub.s32 0, %v808
    %v810 = vrot.slane %v389, %v809
    %v812 = vmul.f32 %v804, %v810
    %813 = vrot.lane.b32.xlu0 %v506, 125
    %v814 = vpop.permute.xlu0 %813
    %v815 = vsel %vm588, %v814, 0
    %v818 = vsel %vm592, %v388, 0
    %820 = vmatprep.subr.mxu0 0.0
    %821 = vmatpush1.msra.mxu0 %v818
    %822 = vmatprep.subr.mxu0 0.0
    %823 = vmatpush1.msra.mxu0 0.0
    %824 = vmatprep.subr.mxu0 0.0
    %825 = vmatpush1.msra.mxu0 0.0
    %826 = vmatprep.subr.mxu0 0.0
    %827 = vmatpush1.msra.mxu0 0.0
    %828 = vmatprep.subr.mxu0 0.0
    %829 = vmatpush1.msra.mxu0 0.0
    %830 = vmatprep.subr.mxu0 0.0
    %831 = vmatpush1.msra.mxu0 0.0
    %832 = vmatprep.subr.mxu0 0.0
    %833 = vmatpush1.msra.mxu0 0.0
    %834 = vmatprep.subr.mxu0 0.0
    %835 = vmatpush1.msra.mxu0 0.0
    %836 = vmatprep.subr.mxu0 0.0
    %837 = vmatpush1.msra.mxu0 0.0
    %838 = vmatprep.subr.mxu0 0.0
    %839 = vmatpush1.msra.mxu0 0.0
    %840 = vmatprep.subr.mxu0 0.0
    %841 = vmatpush1.msra.mxu0 0.0
    %842 = vmatprep.subr.mxu0 0.0
    %843 = vmatpush1.msra.mxu0 0.0
    %844 = vmatprep.subr.mxu0 0.0
    %845 = vmatpush1.msra.mxu0 0.0
    %846 = vmatprep.subr.mxu0 0.0
    %847 = vmatpush1.msra.mxu0 0.0
    %848 = vmatprep.subr.mxu0 0.0
    %849 = vmatpush1.msra.mxu0 0.0
    %850 = vmatprep.subr.mxu0 0.0
    %851 = vmatpush1.msra.mxu0 0.0
    %852 = vmatprep.subr.mxu0 0.0
    %853 = vmatpush1.msra.mxu0 0.0
    %854 = vmatprep.subr.mxu0 0.0
    %855 = vmatpush1.msra.mxu0 0.0
    %856 = vmatprep.subr.mxu0 0.0
    %857 = vmatpush1.msra.mxu0 0.0
    %858 = vmatprep.subr.mxu0 0.0
    %859 = vmatpush1.msra.mxu0 0.0
    %860 = vmatprep.subr.mxu0 0.0
    %861 = vmatpush1.msra.mxu0 0.0
    %862 = vmatprep.subr.mxu0 0.0
    %863 = vmatpush1.msra.mxu0 0.0
    %864 = vmatprep.subr.mxu0 0.0
    %865 = vmatpush1.msra.mxu0 0.0
    %866 = vmatprep.subr.mxu0 0.0
    %867 = vmatpush1.msra.mxu0 0.0
    %868 = vmatprep.subr.mxu0 0.0
    %869 = vmatpush1.msra.mxu0 0.0
    %870 = vmatprep.subr.mxu0 0.0
    %871 = vmatpush1.msra.mxu0 0.0
    %872 = vmatprep.subr.mxu0 0.0
    %873 = vmatpush1.msra.mxu0 0.0
    %874 = vmatprep.subr.mxu0 0.0
    %875 = vmatpush1.msra.mxu0 0.0
    %876 = vmatprep.subr.mxu0 0.0
    %877 = vmatpush1.msra.mxu0 0.0
    %878 = vmatprep.subr.mxu0 0.0
    %879 = vmatpush1.msra.mxu0 0.0
    %880 = vmatprep.subr.mxu0 0.0
    %881 = vmatpush1.msra.mxu0 0.0
    %882 = vmatprep.subr.mxu0 0.0
    %883 = vmatpush1.msra.mxu0 0.0
    %884 = vmatprep.mubr.f32.mxu0 0.0
    %885 = vmatmul.mubr.f32.gmra.mrb[0].mxu0 %v815
    %v886 = vpop.f32.mrb[0].mxu0
    %v887 = vadd.f32 %v812, %v886
    %v888 = vpop.f32.mrb[0].mxu0
    %889 = vdwg.mxu0
    %v891 = vlaneseq
    %v892 = vshrl.u32 %v891, 7
    %v893 = vsub.s32 0, %v892
    %v894 = vrot.slane %v390, %v893
    %v896 = vadd.f32 %v887, %v894
    %v897 = vtanh.pop %v896
    %v898 = vsel %vm765, %v897, 0.0
    %v899 = vrot.slane %v898, 4
    %v900 = vadd.f32 %v898, %v899
    %v901 = vrot.slane %v900, 2
    %v902 = vadd.f32 %v900, %v901
    %v903 = vrot.slane %v902, 1
    %v904 = vadd.f32 %v902, %v903
    %v905 = vmul.f32 %v904, %v773
    %v906 = vsub.f32 %v897, %v905
    %v907 = vmul.f32 %v906, %v906
    %v908 = vsel %vm765, %v907, 0.0
    %v909 = vrot.slane %v908, 4
    %v910 = vadd.f32 %v908, %v909
    %v911 = vrot.slane %v910, 2
    %v912 = vadd.f32 %v910, %v911
    %v913 = vrot.slane %v912, 1
    %v914 = vadd.f32 %v912, %v913
    %v915 = vmul.f32 %v914, %v773
    %v916 = vadd.f32 %v915, 1e-05
    %v917 = vrsqrt.pop %v916
    %v918 = vmul.f32 %v906, %v917
    %v920 = vlaneseq
    %v921 = vshrl.u32 %v920, 7
    %v922 = vsub.s32 0, %v921
    %v923 = vrot.slane %v386, %v922
    %v925 = vmul.f32 %v918, %v923
    %v927 = vlaneseq
    %v928 = vshrl.u32 %v927, 7
    %v929 = vsub.s32 0, %v928
    %v930 = vrot.slane %v387, %v929
    %v932 = vadd.f32 %v925, %v930
    %v934 = vsel %vm765, %v932, 0
    %936 = vmatprep.subr.mxu0 0.0
    %937 = vmatpush1.msra.mxu0 %v394
    %938 = vmatprep.subr.mxu0 0.0
    %939 = vmatpush1.msra.mxu0 0.0
    %940 = vmatprep.subr.mxu0 0.0
    %941 = vmatpush1.msra.mxu0 0.0
    %942 = vmatprep.subr.mxu0 0.0
    %943 = vmatpush1.msra.mxu0 0.0
    %944 = vmatprep.subr.mxu0 0.0
    %945 = vmatpush1.msra.mxu0 0.0
    %946 = vmatprep.subr.mxu0 0.0
    %947 = vmatpush1.msra.mxu0 0.0
    %948 = vmatprep.subr.mxu0 0.0
    %949 = vmatpush1.msra.mxu0 0.0
    %950 = vmatprep.subr.mxu0 0.0
    %951 = vmatpush1.msra.mxu0 0.0
    %952 = vmatprep.subr.mxu0 0.0
    %953 = vmatpush1.msra.mxu0 0.0
    %954 = vmatprep.subr.mxu0 0.0
    %955 = vmatpush1.msra.mxu0 0.0
    %956 = vmatprep.subr.mxu0 0.0
    %957 = vmatpush1.msra.mxu0 0.0
    %958 = vmatprep.subr.mxu0 0.0
    %959 = vmatpush1.msra.mxu0 0.0
    %960 = vmatprep.subr.mxu0 0.0
    %961 = vmatpush1.msra.mxu0 0.0
    %962 = vmatprep.subr.mxu0 0.0
    %963 = vmatpush1.msra.mxu0 0.0
    %964 = vmatprep.subr.mxu0 0.0
    %965 = vmatpush1.msra.mxu0 0.0
    %966 = vmatprep.subr.mxu0 0.0
    %967 = vmatpush1.msra.mxu0 0.0
    %968 = vmatprep.subr.mxu0 0.0
    %969 = vmatpush1.msra.mxu0 0.0
    %970 = vmatprep.subr.mxu0 0.0
    %971 = vmatpush1.msra.mxu0 0.0
    %972 = vmatprep.subr.mxu0 0.0
    %973 = vmatpush1.msra.mxu0 0.0
    %974 = vmatprep.subr.mxu0 0.0
    %975 = vmatpush1.msra.mxu0 0.0
    %976 = vmatprep.subr.mxu0 0.0
    %977 = vmatpush1.msra.mxu0 0.0
    %978 = vmatprep.subr.mxu0 0.0
    %979 = vmatpush1.msra.mxu0 0.0
    %980 = vmatprep.subr.mxu0 0.0
    %981 = vmatpush1.msra.mxu0 0.0
    %982 = vmatprep.subr.mxu0 0.0
    %983 = vmatpush1.msra.mxu0 0.0
    %984 = vmatprep.subr.mxu0 0.0
    %985 = vmatpush1.msra.mxu0 0.0
    %986 = vmatprep.subr.mxu0 0.0
    %987 = vmatpush1.msra.mxu0 0.0
    %988 = vmatprep.subr.mxu0 0.0
    %989 = vmatpush1.msra.mxu0 0.0
    %990 = vmatprep.subr.mxu0 0.0
    %991 = vmatpush1.msra.mxu0 0.0
    %992 = vmatprep.subr.mxu0 0.0
    %993 = vmatpush1.msra.mxu0 0.0
    %994 = vmatprep.subr.mxu0 0.0
    %995 = vmatpush1.msra.mxu0 0.0
    %996 = vmatprep.subr.mxu0 0.0
    %997 = vmatpush1.msra.mxu0 0.0
    %998 = vmatprep.subr.mxu0 0.0
    %999 = vmatpush1.msra.mxu0 0.0
    %1000 = vmatprep.mubr.f32.mxu0 0.0
    %1001 = vmatmul.mubr.f32.gmra.mrb[0].mxu0 %v934
    %v1002 = vpop.f32.mrb[0].mxu0
    %v1003 = vadd.f32 0.0, %v1002
    %v1004 = vpop.f32.mrb[0].mxu0
    %1005 = vdwg.mxu0
    %v1007 = vsel %vm765, %v801, 0
    %1009 = vmatprep.subr.mxu0 0.0
    %1010 = vmatpush1.msra.mxu0 %v393
    %1011 = vmatprep.subr.mxu0 0.0
    %1012 = vmatpush1.msra.mxu0 0.0
    %1013 = vmatprep.subr.mxu0 0.0
    %1014 = vmatpush1.msra.mxu0 0.0
    %1015 = vmatprep.subr.mxu0 0.0
    %1016 = vmatpush1.msra.mxu0 0.0
    %1017 = vmatprep.subr.mxu0 0.0
    %1018 = vmatpush1.msra.mxu0 0.0
    %1019 = vmatprep.subr.mxu0 0.0
    %1020 = vmatpush1.msra.mxu0 0.0
    %1021 = vmatprep.subr.mxu0 0.0
    %1022 = vmatpush1.msra.mxu0 0.0
    %1023 = vmatprep.subr.mxu0 0.0
    %1024 = vmatpush1.msra.mxu0 0.0
    %1025 = vmatprep.subr.mxu0 0.0
    %1026 = vmatpush1.msra.mxu0 0.0
    %1027 = vmatprep.subr.mxu0 0.0
    %1028 = vmatpush1.msra.mxu0 0.0
    %1029 = vmatprep.subr.mxu0 0.0
    %1030 = vmatpush1.msra.mxu0 0.0
    %1031 = vmatprep.subr.mxu0 0.0
    %1032 = vmatpush1.msra.mxu0 0.0
    %1033 = vmatprep.subr.mxu0 0.0
    %1034 = vmatpush1.msra.mxu0 0.0
    %1035 = vmatprep.subr.mxu0 0.0
    %1036 = vmatpush1.msra.mxu0 0.0
    %1037 = vmatprep.subr.mxu0 0.0
    %1038 = vmatpush1.msra.mxu0 0.0
    %1039 = vmatprep.subr.mxu0 0.0
    %1040 = vmatpush1.msra.mxu0 0.0
    %1041 = vmatprep.subr.mxu0 0.0
    %1042 = vmatpush1.msra.mxu0 0.0
    %1043 = vmatprep.subr.mxu0 0.0
    %1044 = vmatpush1.msra.mxu0 0.0
    %1045 = vmatprep.subr.mxu0 0.0
    %1046 = vmatpush1.msra.mxu0 0.0
    %1047 = vmatprep.subr.mxu0 0.0
    %1048 = vmatpush1.msra.mxu0 0.0
    %1049 = vmatprep.subr.mxu0 0.0
    %1050 = vmatpush1.msra.mxu0 0.0
    %1051 = vmatprep.subr.mxu0 0.0
    %1052 = vmatpush1.msra.mxu0 0.0
    %1053 = vmatprep.subr.mxu0 0.0
    %1054 = vmatpush1.msra.mxu0 0.0
    %1055 = vmatprep.subr.mxu0 0.0
    %1056 = vmatpush1.msra.mxu0 0.0
    %1057 = vmatprep.subr.mxu0 0.0
    %1058 = vmatpush1.msra.mxu0 0.0
    %1059 = vmatprep.subr.mxu0 0.0
    %1060 = vmatpush1.msra.mxu0 0.0
    %1061 = vmatprep.subr.mxu0 0.0
    %1062 = vmatpush1.msra.mxu0 0.0
    %1063 = vmatprep.subr.mxu0 0.0
    %1064 = vmatpush1.msra.mxu0 0.0
    %1065 = vmatprep.subr.mxu0 0.0
    %1066 = vmatpush1.msra.mxu0 0.0
    %1067 = vmatprep.subr.mxu0 0.0
    %1068 = vmatpush1.msra.mxu0 0.0
    %1069 = vmatprep.subr.mxu0 0.0
    %1070 = vmatpush1.msra.mxu0 0.0
    %1071 = vmatprep.subr.mxu0 0.0
    %1072 = vmatpush1.msra.mxu0 0.0
    %1073 = vmatprep.mubr.f32.mxu0 0.0
    %1074 = vmatmul.mubr.f32.gmra.mrb[0].mxu0 %v1007
    %v1075 = vpop.f32.mrb[0].mxu0
    %v1076 = vadd.f32 %v1003, %v1075
    %v1077 = vpop.f32.mrb[0].mxu0
    %1078 = vdwg.mxu0
    %1079 = vrot.lane.b32.xlu0 %v506, 123
    %v1080 = vpop.permute.xlu0 %1079
    %vm1081 = vcmask 31744
    %v1082 = vsel %vm1081, %v1080, 0
    %vm1084 = vcmask 1043456
    %v1086 = vsel %vm1084, %v395, 0
    %1088 = vmatprep.subr.mxu0 0.0
    %1089 = vmatpush1.msra.mxu0 %v1086
    %1090 = vmatprep.subr.mxu0 0.0
    %1091 = vmatpush1.msra.mxu0 0.0
    %1092 = vmatprep.subr.mxu0 0.0
    %1093 = vmatpush1.msra.mxu0 0.0
    %1094 = vmatprep.subr.mxu0 0.0
    %1095 = vmatpush1.msra.mxu0 0.0
    %1096 = vmatprep.subr.mxu0 0.0
    %1097 = vmatpush1.msra.mxu0 0.0
    %1098 = vmatprep.subr.mxu0 0.0
    %1099 = vmatpush1.msra.mxu0 0.0
    %1100 = vmatprep.subr.mxu0 0.0
    %1101 = vmatpush1.msra.mxu0 0.0
    %1102 = vmatprep.subr.mxu0 0.0
    %1103 = vmatpush1.msra.mxu0 0.0
    %1104 = vmatprep.subr.mxu0 0.0
    %1105 = vmatpush1.msra.mxu0 0.0
    %1106 = vmatprep.subr.mxu0 0.0
    %1107 = vmatpush1.msra.mxu0 0.0
    %1108 = vmatprep.subr.mxu0 0.0
    %1109 = vmatpush1.msra.mxu0 0.0
    %1110 = vmatprep.subr.mxu0 0.0
    %1111 = vmatpush1.msra.mxu0 0.0
    %1112 = vmatprep.subr.mxu0 0.0
    %1113 = vmatpush1.msra.mxu0 0.0
    %1114 = vmatprep.subr.mxu0 0.0
    %1115 = vmatpush1.msra.mxu0 0.0
    %1116 = vmatprep.subr.mxu0 0.0
    %1117 = vmatpush1.msra.mxu0 0.0
    %1118 = vmatprep.subr.mxu0 0.0
    %1119 = vmatpush1.msra.mxu0 0.0
    %1120 = vmatprep.subr.mxu0 0.0
    %1121 = vmatpush1.msra.mxu0 0.0
    %1122 = vmatprep.subr.mxu0 0.0
    %1123 = vmatpush1.msra.mxu0 0.0
    %1124 = vmatprep.subr.mxu0 0.0
    %1125 = vmatpush1.msra.mxu0 0.0
    %1126 = vmatprep.subr.mxu0 0.0
    %1127 = vmatpush1.msra.mxu0 0.0
    %1128 = vmatprep.subr.mxu0 0.0
    %1129 = vmatpush1.msra.mxu0 0.0
    %1130 = vmatprep.subr.mxu0 0.0
    %1131 = vmatpush1.msra.mxu0 0.0
    %1132 = vmatprep.subr.mxu0 0.0
    %1133 = vmatpush1.msra.mxu0 0.0
    %1134 = vmatprep.subr.mxu0 0.0
    %1135 = vmatpush1.msra.mxu0 0.0
    %1136 = vmatprep.subr.mxu0 0.0
    %1137 = vmatpush1.msra.mxu0 0.0
    %1138 = vmatprep.subr.mxu0 0.0
    %1139 = vmatpush1.msra.mxu0 0.0
    %1140 = vmatprep.subr.mxu0 0.0
    %1141 = vmatpush1.msra.mxu0 0.0
    %1142 = vmatprep.subr.mxu0 0.0
    %1143 = vmatpush1.msra.mxu0 0.0
    %1144 = vmatprep.subr.mxu0 0.0
    %1145 = vmatpush1.msra.mxu0 0.0
    %1146 = vmatprep.subr.mxu0 0.0
    %1147 = vmatpush1.msra.mxu0 0.0
    %1148 = vmatprep.subr.mxu0 0.0
    %1149 = vmatpush1.msra.mxu0 0.0
    %1150 = vmatprep.subr.mxu0 0.0
    %1151 = vmatpush1.msra.mxu0 0.0
    %1152 = vmatprep.mubr.f32.mxu0 0.0
    %1153 = vmatmul.mubr.f32.gmra.mrb[0].mxu0 %v1082
    %v1154 = vpop.f32.mrb[0].mxu0
    %v1155 = vadd.f32 0.0, %v1154
    %v1156 = vpop.f32.mrb[0].mxu0
    %1157 = vdwg.mxu0
    %v1158 = vadd.f32 %v1076, %v1155
    %1159 = vrot.lane.b32.xlu0 %v585, 126
    %v1160 = vpop.permute.xlu0 %1159
    %v1161 = vsel %vm588, %v1160, 0
    %v1164 = vsel %vm592, %v396, 0
    %1166 = vmatprep.subr.mxu0 0.0
    %1167 = vmatpush1.msra.mxu0 %v1164
    %1168 = vmatprep.subr.mxu0 0.0
    %1169 = vmatpush1.msra.mxu0 0.0
    %1170 = vmatprep.subr.mxu0 0.0
    %1171 = vmatpush1.msra.mxu0 0.0
    %1172 = vmatprep.subr.mxu0 0.0
    %1173 = vmatpush1.msra.mxu0 0.0
    %1174 = vmatprep.subr.mxu0 0.0
    %1175 = vmatpush1.msra.mxu0 0.0
    %1176 = vmatprep.subr.mxu0 0.0
    %1177 = vmatpush1.msra.mxu0 0.0
    %1178 = vmatprep.subr.mxu0 0.0
    %1179 = vmatpush1.msra.mxu0 0.0
    %1180 = vmatprep.subr.mxu0 0.0
    %1181 = vmatpush1.msra.mxu0 0.0
    %1182 = vmatprep.subr.mxu0 0.0
    %1183 = vmatpush1.msra.mxu0 0.0
    %1184 = vmatprep.subr.mxu0 0.0
    %1185 = vmatpush1.msra.mxu0 0.0
    %1186 = vmatprep.subr.mxu0 0.0
    %1187 = vmatpush1.msra.mxu0 0.0
    %1188 = vmatprep.subr.mxu0 0.0
    %1189 = vmatpush1.msra.mxu0 0.0
    %1190 = vmatprep.subr.mxu0 0.0
    %1191 = vmatpush1.msra.mxu0 0.0
    %1192 = vmatprep.subr.mxu0 0.0
    %1193 = vmatpush1.msra.mxu0 0.0
    %1194 = vmatprep.subr.mxu0 0.0
    %1195 = vmatpush1.msra.mxu0 0.0
    %1196 = vmatprep.subr.mxu0 0.0
    %1197 = vmatpush1.msra.mxu0 0.0
    %1198 = vmatprep.subr.mxu0 0.0
    %1199 = vmatpush1.msra.mxu0 0.0
    %1200 = vmatprep.subr.mxu0 0.0
    %1201 = vmatpush1.msra.mxu0 0.0
    %1202 = vmatprep.subr.mxu0 0.0
    %1203 = vmatpush1.msra.mxu0 0.0
    %1204 = vmatprep.subr.mxu0 0.0
    %1205 = vmatpush1.msra.mxu0 0.0
    %1206 = vmatprep.subr.mxu0 0.0
    %1207 = vmatpush1.msra.mxu0 0.0
    %1208 = vmatprep.subr.mxu0 0.0
    %1209 = vmatpush1.msra.mxu0 0.0
    %1210 = vmatprep.subr.mxu0 0.0
    %1211 = vmatpush1.msra.mxu0 0.0
    %1212 = vmatprep.subr.mxu0 0.0
    %1213 = vmatpush1.msra.mxu0 0.0
    %1214 = vmatprep.subr.mxu0 0.0
    %1215 = vmatpush1.msra.mxu0 0.0
    %1216 = vmatprep.subr.mxu0 0.0
    %1217 = vmatpush1.msra.mxu0 0.0
    %1218 = vmatprep.subr.mxu0 0.0
    %1219 = vmatpush1.msra.mxu0 0.0
    %1220 = vmatprep.subr.mxu0 0.0
    %1221 = vmatpush1.msra.mxu0 0.0
    %1222 = vmatprep.subr.mxu0 0.0
    %1223 = vmatpush1.msra.mxu0 0.0
    %1224 = vmatprep.subr.mxu0 0.0
    %1225 = vmatpush1.msra.mxu0 0.0
    %1226 = vmatprep.subr.mxu0 0.0
    %1227 = vmatpush1.msra.mxu0 0.0
    %1228 = vmatprep.subr.mxu0 0.0
    %1229 = vmatpush1.msra.mxu0 0.0
    %1230 = vmatprep.mubr.f32.mxu0 0.0
    %1231 = vmatmul.mubr.f32.gmra.mrb[0].mxu0 %v1161
    %v1232 = vpop.f32.mrb[0].mxu0
    %v1233 = vadd.f32 0.0, %v1232
    %v1234 = vpop.f32.mrb[0].mxu0
    %1235 = vdwg.mxu0
    %v1236 = vadd.f32 %v1158, %v1233
    %1237 = vset.pattern.permute.xlu0 2
    %1238 = vperm.xlu0 %1237, %v428
    %v1239 = vpop.permute.xlu0 %1238
    %v1242 = vlaneseq
    %v1243 = vshrl.u32 %v1242, 7
    %v1244 = vsub.s32 0, %v1243
    %v1245 = vrot.slane %v397, %v1244
    %v1247 = vmul.f32 %v1239, %v1245
    %v1248 = vadd.f32 %v1236, %v1247
    %v1250 = vlaneseq
    %v1251 = vshrl.u32 %v1250, 7
    %v1252 = vsub.s32 0, %v1251
    %v1253 = vrot.slane %v398, %v1252
    %v1255 = vmul.f32 %v747, %v1253
    %v1256 = vadd.f32 %v1248, %v1255
    %v1258 = vlaneseq
    %v1259 = vshrl.u32 %v1258, 7
    %v1260 = vsub.s32 0, %v1259
    %v1261 = vrot.slane %v399, %v1260
    %v1263 = vmul.f32 %v804, %v1261
    %v1264 = vadd.f32 %v1256, %v1263
    %v1266 = vlaneseq
    %v1267 = vshrl.u32 %v1266, 7
    %v1268 = vsub.s32 0, %v1267
    %v1269 = vrot.slane %v400, %v1268
    %v1271 = vadd.f32 %v1264, %v1269
    %v1272 = vtanh.pop %v1271
    %v1273 = vsel %vm765, %v1272, 0.0
    %v1274 = vrot.slane %v1273, 4
    %v1275 = vadd.f32 %v1273, %v1274
    %v1276 = vrot.slane %v1275, 2
    %v1277 = vadd.f32 %v1275, %v1276
    %v1278 = vrot.slane %v1277, 1
    %v1279 = vadd.f32 %v1277, %v1278
    %v1280 = vmul.f32 %v1279, %v773
    %v1281 = vsub.f32 %v1272, %v1280
    %v1282 = vmul.f32 %v1281, %v1281
    %v1283 = vsel %vm765, %v1282, 0.0
    %v1284 = vrot.slane %v1283, 4
    %v1285 = vadd.f32 %v1283, %v1284
    %v1286 = vrot.slane %v1285, 2
    %v1287 = vadd.f32 %v1285, %v1286
    %v1288 = vrot.slane %v1287, 1
    %v1289 = vadd.f32 %v1287, %v1288
    %v1290 = vmul.f32 %v1289, %v773
    %v1291 = vadd.f32 %v1290, 1e-05
    %v1292 = vrsqrt.pop %v1291
    %v1293 = vmul.f32 %v1281, %v1292
    %v1295 = vlaneseq
    %v1296 = vshrl.u32 %v1295, 7
    %v1297 = vsub.s32 0, %v1296
    %v1298 = vrot.slane %v391, %v1297
    %v1300 = vmul.f32 %v1293, %v1298
    %v1302 = vlaneseq
    %v1303 = vshrl.u32 %v1302, 7
    %v1304 = vsub.s32 0, %v1303
    %v1305 = vrot.slane %v392, %v1304
    %v1307 = vadd.f32 %v1300, %v1305
    %v1309 = vlaneseq
    %v1310 = vshrl.u32 %v1309, 7
    %v1311 = vsub.s32 0, %v1310
    %v1312 = vrot.slane %v408, %v1311
    %vm1314 = vcmask 195584
    %v1316 = vsel %vm1314, %v427, 0
    %1318 = vmatprep.subr.mxu0 0.0
    %1319 = vmatpush1.msra.mxu0 %v405
    %1320 = vmatprep.subr.mxu0 0.0
    %1321 = vmatpush1.msra.mxu0 %v406
    %1322 = vmatprep.subr.mxu0 0.0
    %1323 = vmatpush1.msra.mxu0 %v407
    %1324 = vmatprep.subr.mxu0 0.0
    %1325 = vmatpush1.msra.mxu0 0.0
    %1326 = vmatprep.subr.mxu0 0.0
    %1327 = vmatpush1.msra.mxu0 0.0
    %1328 = vmatprep.subr.mxu0 0.0
    %1329 = vmatpush1.msra.mxu0 0.0
    %1330 = vmatprep.subr.mxu0 0.0
    %1331 = vmatpush1.msra.mxu0 0.0
    %1332 = vmatprep.subr.mxu0 0.0
    %1333 = vmatpush1.msra.mxu0 0.0
    %1334 = vmatprep.subr.mxu0 0.0
    %1335 = vmatpush1.msra.mxu0 0.0
    %1336 = vmatprep.subr.mxu0 0.0
    %1337 = vmatpush1.msra.mxu0 0.0
    %1338 = vmatprep.subr.mxu0 0.0
    %1339 = vmatpush1.msra.mxu0 0.0
    %1340 = vmatprep.subr.mxu0 0.0
    %1341 = vmatpush1.msra.mxu0 0.0
    %1342 = vmatprep.subr.mxu0 0.0
    %1343 = vmatpush1.msra.mxu0 0.0
    %1344 = vmatprep.subr.mxu0 0.0
    %1345 = vmatpush1.msra.mxu0 0.0
    %1346 = vmatprep.subr.mxu0 0.0
    %1347 = vmatpush1.msra.mxu0 0.0
    %1348 = vmatprep.subr.mxu0 0.0
    %1349 = vmatpush1.msra.mxu0 0.0
    %1350 = vmatprep.subr.mxu0 0.0
    %1351 = vmatpush1.msra.mxu0 0.0
    %1352 = vmatprep.subr.mxu0 0.0
    %1353 = vmatpush1.msra.mxu0 0.0
    %1354 = vmatprep.subr.mxu0 0.0
    %1355 = vmatpush1.msra.mxu0 0.0
    %1356 = vmatprep.subr.mxu0 0.0
    %1357 = vmatpush1.msra.mxu0 0.0
    %1358 = vmatprep.subr.mxu0 0.0
    %1359 = vmatpush1.msra.mxu0 0.0
    %1360 = vmatprep.subr.mxu0 0.0
    %1361 = vmatpush1.msra.mxu0 0.0
    %1362 = vmatprep.subr.mxu0 0.0
    %1363 = vmatpush1.msra.mxu0 0.0
    %1364 = vmatprep.subr.mxu0 0.0
    %1365 = vmatpush1.msra.mxu0 0.0
    %1366 = vmatprep.subr.mxu0 0.0
    %1367 = vmatpush1.msra.mxu0 0.0
    %1368 = vmatprep.subr.mxu0 0.0
    %1369 = vmatpush1.msra.mxu0 0.0
    %1370 = vmatprep.subr.mxu0 0.0
    %1371 = vmatpush1.msra.mxu0 0.0
    %1372 = vmatprep.subr.mxu0 0.0
    %1373 = vmatpush1.msra.mxu0 0.0
    %1374 = vmatprep.subr.mxu0 0.0
    %1375 = vmatpush1.msra.mxu0 0.0
    %1376 = vmatprep.subr.mxu0 0.0
    %1377 = vmatpush1.msra.mxu0 0.0
    %1378 = vmatprep.subr.mxu0 0.0
    %1379 = vmatpush1.msra.mxu0 0.0
    %1380 = vmatprep.subr.mxu0 0.0
    %1381 = vmatpush1.msra.mxu0 0.0
    %1382 = vmatprep.mubr.f32.mxu0 0.0
    %1383 = vmatmul.mubr.f32.gmra.mrb[0].mxu0 %v1316
    %v1384 = vpop.f32.mrb[0].mxu0
    %v1385 = vadd.f32 %v1312, %v1384
    %v1386 = vpop.f32.mrb[0].mxu0
    %1387 = vdwg.mxu0
    %v1388 = vtanh.pop %v1385
    %v1389 = vsel %vm435, %v1388, 0.0
    %v1390 = vrot.slane %v1389, 4
    %v1391 = vadd.f32 %v1389, %v1390
    %v1392 = vrot.slane %v1391, 2
    %v1393 = vadd.f32 %v1391, %v1392
    %v1394 = vrot.slane %v1393, 1
    %v1395 = vadd.f32 %v1393, %v1394
    %v1396 = vmul.f32 %v1395, %v773
    %v1397 = vsub.f32 %v1388, %v1396
    %v1398 = vmul.f32 %v1397, %v1397
    %v1399 = vsel %vm435, %v1398, 0.0
    %v1400 = vrot.slane %v1399, 4
    %v1401 = vadd.f32 %v1399, %v1400
    %v1402 = vrot.slane %v1401, 2
    %v1403 = vadd.f32 %v1401, %v1402
    %v1404 = vrot.slane %v1403, 1
    %v1405 = vadd.f32 %v1403, %v1404
    %v1406 = vmul.f32 %v1405, %v773
    %v1407 = vadd.f32 %v1406, 1e-05
    %v1408 = vrsqrt.pop %v1407
    %v1409 = vmul.f32 %v1397, %v1408
    %v1411 = vlaneseq
    %v1412 = vshrl.u32 %v1411, 7
    %v1413 = vsub.s32 0, %v1412
    %v1414 = vrot.slane %v401, %v1413
    %v1416 = vmul.f32 %v1409, %v1414
    %v1418 = vlaneseq
    %v1419 = vshrl.u32 %v1418, 7
    %v1420 = vsub.s32 0, %v1419
    %v1421 = vrot.slane %v402, %v1420
    %v1423 = vadd.f32 %v1416, %v1421
    %v1425 = vlaneseq
    %v1426 = vshrl.u32 %v1425, 7
    %v1427 = vsub.s32 0, %v1426
    %v1428 = vrot.slane %v411, %v1427
    %v1431 = vsel %vm435, %v1423, 0
    %1433 = vmatprep.subr.mxu0 0.0
    %1434 = vmatpush1.msra.mxu0 %v409
    %1435 = vmatprep.subr.mxu0 0.0
    %1436 = vmatpush1.msra.mxu0 %v410
    %1437 = vmatprep.subr.mxu0 0.0
    %1438 = vmatpush1.msra.mxu0 0.0
    %1439 = vmatprep.subr.mxu0 0.0
    %1440 = vmatpush1.msra.mxu0 0.0
    %1441 = vmatprep.subr.mxu0 0.0
    %1442 = vmatpush1.msra.mxu0 0.0
    %1443 = vmatprep.subr.mxu0 0.0
    %1444 = vmatpush1.msra.mxu0 0.0
    %1445 = vmatprep.subr.mxu0 0.0
    %1446 = vmatpush1.msra.mxu0 0.0
    %1447 = vmatprep.subr.mxu0 0.0
    %1448 = vmatpush1.msra.mxu0 0.0
    %1449 = vmatprep.subr.mxu0 0.0
    %1450 = vmatpush1.msra.mxu0 0.0
    %1451 = vmatprep.subr.mxu0 0.0
    %1452 = vmatpush1.msra.mxu0 0.0
    %1453 = vmatprep.subr.mxu0 0.0
    %1454 = vmatpush1.msra.mxu0 0.0
    %1455 = vmatprep.subr.mxu0 0.0
    %1456 = vmatpush1.msra.mxu0 0.0
    %1457 = vmatprep.subr.mxu0 0.0
    %1458 = vmatpush1.msra.mxu0 0.0
    %1459 = vmatprep.subr.mxu0 0.0
    %1460 = vmatpush1.msra.mxu0 0.0
    %1461 = vmatprep.subr.mxu0 0.0
    %1462 = vmatpush1.msra.mxu0 0.0
    %1463 = vmatprep.subr.mxu0 0.0
    %1464 = vmatpush1.msra.mxu0 0.0
    %1465 = vmatprep.subr.mxu0 0.0
    %1466 = vmatpush1.msra.mxu0 0.0
    %1467 = vmatprep.subr.mxu0 0.0
    %1468 = vmatpush1.msra.mxu0 0.0
    %1469 = vmatprep.subr.mxu0 0.0
    %1470 = vmatpush1.msra.mxu0 0.0
    %1471 = vmatprep.subr.mxu0 0.0
    %1472 = vmatpush1.msra.mxu0 0.0
    %1473 = vmatprep.subr.mxu0 0.0
    %1474 = vmatpush1.msra.mxu0 0.0
    %1475 = vmatprep.subr.mxu0 0.0
    %1476 = vmatpush1.msra.mxu0 0.0
    %1477 = vmatprep.subr.mxu0 0.0
    %1478 = vmatpush1.msra.mxu0 0.0
    %1479 = vmatprep.subr.mxu0 0.0
    %1480 = vmatpush1.msra.mxu0 0.0
    %1481 = vmatprep.subr.mxu0 0.0
    %1482 = vmatpush1.msra.mxu0 0.0
    %1483 = vmatprep.subr.mxu0 0.0
    %1484 = vmatpush1.msra.mxu0 0.0
    %1485 = vmatprep.subr.mxu0 0.0
    %1486 = vmatpush1.msra.mxu0 0.0
    %1487 = vmatprep.subr.mxu0 0.0
    %1488 = vmatpush1.msra.mxu0 0.0
    %1489 = vmatprep.subr.mxu0 0.0
    %1490 = vmatpush1.msra.mxu0 0.0
    %1491 = vmatprep.subr.mxu0 0.0
    %1492 = vmatpush1.msra.mxu0 0.0
    %1493 = vmatprep.subr.mxu0 0.0
    %1494 = vmatpush1.msra.mxu0 0.0
    %1495 = vmatprep.subr.mxu0 0.0
    %1496 = vmatpush1.msra.mxu0 0.0
    %1497 = vmatprep.mubr.f32.mxu0 0.0
    %1498 = vmatmul.mubr.f32.gmra.mrb[0].mxu0 %v1431
    %v1499 = vpop.f32.mrb[0].mxu0
    %v1500 = vadd.f32 %v1428, %v1499
    %v1501 = vpop.f32.mrb[0].mxu0
    %1502 = vdwg.mxu0
    %v1503 = vtanh.pop %v1500
    %v1504 = vsel %vm765, %v1503, 0.0
    %v1505 = vrot.slane %v1504, 4
    %v1506 = vadd.f32 %v1504, %v1505
    %v1507 = vrot.slane %v1506, 2
    %v1508 = vadd.f32 %v1506, %v1507
    %v1509 = vrot.slane %v1508, 1
    %v1510 = vadd.f32 %v1508, %v1509
    %v1511 = vmul.f32 %v1510, %v773
    %v1512 = vsub.f32 %v1503, %v1511
    %v1513 = vmul.f32 %v1512, %v1512
    %v1514 = vsel %vm765, %v1513, 0.0
    %v1515 = vrot.slane %v1514, 4
    %v1516 = vadd.f32 %v1514, %v1515
    %v1517 = vrot.slane %v1516, 2
    %v1518 = vadd.f32 %v1516, %v1517
    %v1519 = vrot.slane %v1518, 1
    %v1520 = vadd.f32 %v1518, %v1519
    %v1521 = vmul.f32 %v1520, %v773
    %v1522 = vadd.f32 %v1521, 1e-05
    %v1523 = vrsqrt.pop %v1522
    %v1524 = vmul.f32 %v1512, %v1523
    %v1526 = vlaneseq
    %v1527 = vshrl.u32 %v1526, 7
    %v1528 = vsub.s32 0, %v1527
    %v1529 = vrot.slane %v403, %v1528
    %v1531 = vmul.f32 %v1524, %v1529
    %v1533 = vlaneseq
    %v1534 = vshrl.u32 %v1533, 7
    %v1535 = vsub.s32 0, %v1534
    %v1536 = vrot.slane %v404, %v1535
    %v1538 = vadd.f32 %v1531, %v1536
    %v1540 = vsel %vm765, %v1538, 0
    %1542 = vmatprep.subr.mxu0 0.0
    %1543 = vmatpush1.msra.mxu0 %v415
    %1544 = vmatprep.subr.mxu0 0.0
    %1545 = vmatpush1.msra.mxu0 0.0
    %1546 = vmatprep.subr.mxu0 0.0
    %1547 = vmatpush1.msra.mxu0 0.0
    %1548 = vmatprep.subr.mxu0 0.0
    %1549 = vmatpush1.msra.mxu0 0.0
    %1550 = vmatprep.subr.mxu0 0.0
    %1551 = vmatpush1.msra.mxu0 0.0
    %1552 = vmatprep.subr.mxu0 0.0
    %1553 = vmatpush1.msra.mxu0 0.0
    %1554 = vmatprep.subr.mxu0 0.0
    %1555 = vmatpush1.msra.mxu0 0.0
    %1556 = vmatprep.subr.mxu0 0.0
    %1557 = vmatpush1.msra.mxu0 0.0
    %1558 = vmatprep.subr.mxu0 0.0
    %1559 = vmatpush1.msra.mxu0 0.0
    %1560 = vmatprep.subr.mxu0 0.0
    %1561 = vmatpush1.msra.mxu0 0.0
    %1562 = vmatprep.subr.mxu0 0.0
    %1563 = vmatpush1.msra.mxu0 0.0
    %1564 = vmatprep.subr.mxu0 0.0
    %1565 = vmatpush1.msra.mxu0 0.0
    %1566 = vmatprep.subr.mxu0 0.0
    %1567 = vmatpush1.msra.mxu0 0.0
    %1568 = vmatprep.subr.mxu0 0.0
    %1569 = vmatpush1.msra.mxu0 0.0
    %1570 = vmatprep.subr.mxu0 0.0
    %1571 = vmatpush1.msra.mxu0 0.0
    %1572 = vmatprep.subr.mxu0 0.0
    %1573 = vmatpush1.msra.mxu0 0.0
    %1574 = vmatprep.subr.mxu0 0.0
    %1575 = vmatpush1.msra.mxu0 0.0
    %1576 = vmatprep.subr.mxu0 0.0
    %1577 = vmatpush1.msra.mxu0 0.0
    %1578 = vmatprep.subr.mxu0 0.0
    %1579 = vmatpush1.msra.mxu0 0.0
    %1580 = vmatprep.subr.mxu0 0.0
    %1581 = vmatpush1.msra.mxu0 0.0
    %1582 = vmatprep.subr.mxu0 0.0
    %1583 = vmatpush1.msra.mxu0 0.0
    %1584 = vmatprep.subr.mxu0 0.0
    %1585 = vmatpush1.msra.mxu0 0.0
    %1586 = vmatprep.subr.mxu0 0.0
    %1587 = vmatpush1.msra.mxu0 0.0
    %1588 = vmatprep.subr.mxu0 0.0
    %1589 = vmatpush1.msra.mxu0 0.0
    %1590 = vmatprep.subr.mxu0 0.0
    %1591 = vmatpush1.msra.mxu0 0.0
    %1592 = vmatprep.subr.mxu0 0.0
    %1593 = vmatpush1.msra.mxu0 0.0
    %1594 = vmatprep.subr.mxu0 0.0
    %1595 = vmatpush1.msra.mxu0 0.0
    %1596 = vmatprep.subr.mxu0 0.0
    %1597 = vmatpush1.msra.mxu0 0.0
    %1598 = vmatprep.subr.mxu0 0.0
    %1599 = vmatpush1.msra.mxu0 0.0
    %1600 = vmatprep.subr.mxu0 0.0
    %1601 = vmatpush1.msra.mxu0 0.0
    %1602 = vmatprep.subr.mxu0 0.0
    %1603 = vmatpush1.msra.mxu0 0.0
    %1604 = vmatprep.subr.mxu0 0.0
    %1605 = vmatpush1.msra.mxu0 0.0
    %1606 = vmatprep.mubr.f32.mxu0 0.0
    %1607 = vmatmul.mubr.f32.gmra.mrb[0].mxu0 %v1540
    %v1608 = vpop.f32.mrb[0].mxu0
    %v1609 = vadd.f32 0.0, %v1608
    %v1610 = vpop.f32.mrb[0].mxu0
    %1611 = vdwg.mxu0
    %v1613 = vsel %vm765, %v1307, 0
    %1615 = vmatprep.subr.mxu0 0.0
    %1616 = vmatpush1.msra.mxu0 %v414
    %1617 = vmatprep.subr.mxu0 0.0
    %1618 = vmatpush1.msra.mxu0 0.0
    %1619 = vmatprep.subr.mxu0 0.0
    %1620 = vmatpush1.msra.mxu0 0.0
    %1621 = vmatprep.subr.mxu0 0.0
    %1622 = vmatpush1.msra.mxu0 0.0
    %1623 = vmatprep.subr.mxu0 0.0
    %1624 = vmatpush1.msra.mxu0 0.0
    %1625 = vmatprep.subr.mxu0 0.0
    %1626 = vmatpush1.msra.mxu0 0.0
    %1627 = vmatprep.subr.mxu0 0.0
    %1628 = vmatpush1.msra.mxu0 0.0
    %1629 = vmatprep.subr.mxu0 0.0
    %1630 = vmatpush1.msra.mxu0 0.0
    %1631 = vmatprep.subr.mxu0 0.0
    %1632 = vmatpush1.msra.mxu0 0.0
    %1633 = vmatprep.subr.mxu0 0.0
    %1634 = vmatpush1.msra.mxu0 0.0
    %1635 = vmatprep.subr.mxu0 0.0
    %1636 = vmatpush1.msra.mxu0 0.0
    %1637 = vmatprep.subr.mxu0 0.0
    %1638 = vmatpush1.msra.mxu0 0.0
    %1639 = vmatprep.subr.mxu0 0.0
    %1640 = vmatpush1.msra.mxu0 0.0
    %1641 = vmatprep.subr.mxu0 0.0
    %1642 = vmatpush1.msra.mxu0 0.0
    %1643 = vmatprep.subr.mxu0 0.0
    %1644 = vmatpush1.msra.mxu0 0.0
    %1645 = vmatprep.subr.mxu0 0.0
    %1646 = vmatpush1.msra.mxu0 0.0
    %1647 = vmatprep.subr.mxu0 0.0
    %1648 = vmatpush1.msra.mxu0 0.0
    %1649 = vmatprep.subr.mxu0 0.0
    %1650 = vmatpush1.msra.mxu0 0.0
    %1651 = vmatprep.subr.mxu0 0.0
    %1652 = vmatpush1.msra.mxu0 0.0
    %1653 = vmatprep.subr.mxu0 0.0
    %1654 = vmatpush1.msra.mxu0 0.0
    %1655 = vmatprep.subr.mxu0 0.0
    %1656 = vmatpush1.msra.mxu0 0.0
    %1657 = vmatprep.subr.mxu0 0.0
    %1658 = vmatpush1.msra.mxu0 0.0
    %1659 = vmatprep.subr.mxu0 0.0
    %1660 = vmatpush1.msra.mxu0 0.0
    %1661 = vmatprep.subr.mxu0 0.0
    %1662 = vmatpush1.msra.mxu0 0.0
    %1663 = vmatprep.subr.mxu0 0.0
    %1664 = vmatpush1.msra.mxu0 0.0
    %1665 = vmatprep.subr.mxu0 0.0
    %1666 = vmatpush1.msra.mxu0 0.0
    %1667 = vmatprep.subr.mxu0 0.0
    %1668 = vmatpush1.msra.mxu0 0.0
    %1669 = vmatprep.subr.mxu0 0.0
    %1670 = vmatpush1.msra.mxu0 0.0
    %1671 = vmatprep.subr.mxu0 0.0
    %1672 = vmatpush1.msra.mxu0 0.0
    %1673 = vmatprep.subr.mxu0 0.0
    %1674 = vmatpush1.msra.mxu0 0.0
    %1675 = vmatprep.subr.mxu0 0.0
    %1676 = vmatpush1.msra.mxu0 0.0
    %1677 = vmatprep.subr.mxu0 0.0
    %1678 = vmatpush1.msra.mxu0 0.0
    %1679 = vmatprep.mubr.f32.mxu0 0.0
    %1680 = vmatmul.mubr.f32.gmra.mrb[0].mxu0 %v1613
    %v1681 = vpop.f32.mrb[0].mxu0
    %v1682 = vadd.f32 %v1609, %v1681
    %v1683 = vpop.f32.mrb[0].mxu0
    %1684 = vdwg.mxu0
    %v1686 = vlaneseq
    %v1687 = vshrl.u32 %v1686, 7
    %v1688 = vsub.s32 0, %v1687
    %v1689 = vrot.slane %v416, %v1688
    %v1691 = vadd.f32 %v1682, %v1689
    %v1692 = vtanh.pop %v1691
    %v1693 = vsel %vm765, %v1692, 0.0
    %v1694 = vrot.slane %v1693, 4
    %v1695 = vadd.f32 %v1693, %v1694
    %v1696 = vrot.slane %v1695, 2
    %v1697 = vadd.f32 %v1695, %v1696
    %v1698 = vrot.slane %v1697, 1
    %v1699 = vadd.f32 %v1697, %v1698
    %v1700 = vmul.f32 %v1699, %v773
    %v1701 = vsub.f32 %v1692, %v1700
    %v1702 = vmul.f32 %v1701, %v1701
    %v1703 = vsel %vm765, %v1702, 0.0
    %v1704 = vrot.slane %v1703, 4
    %v1705 = vadd.f32 %v1703, %v1704
    %v1706 = vrot.slane %v1705, 2
    %v1707 = vadd.f32 %v1705, %v1706
    %v1708 = vrot.slane %v1707, 1
    %v1709 = vadd.f32 %v1707, %v1708
    %v1710 = vmul.f32 %v1709, %v773
    %v1711 = vadd.f32 %v1710, 1e-05
    %v1712 = vrsqrt.pop %v1711
    %v1713 = vmul.f32 %v1701, %v1712
    %v1715 = vlaneseq
    %v1716 = vshrl.u32 %v1715, 7
    %v1717 = vsub.s32 0, %v1716
    %v1718 = vrot.slane %v412, %v1717
    %v1720 = vmul.f32 %v1713, %v1718
    %v1722 = vlaneseq
    %v1723 = vshrl.u32 %v1722, 7
    %v1724 = vsub.s32 0, %v1723
    %v1725 = vrot.slane %v413, %v1724
    %v1727 = vadd.f32 %v1720, %v1725
    %v1729 = vlaneseq
    %v1730 = vshrl.u32 %v1729, 7
    %v1731 = vsub.s32 0, %v1730
    %v1732 = vrot.slane %v418, %v1731
    %v1735 = vsel %vm765, %v1727, 0
    %1737 = vmatprep.subr.mxu0 0.0
    %1738 = vmatpush1.msra.mxu0 %v417
    %1739 = vmatprep.subr.mxu0 0.0
    %1740 = vmatpush1.msra.mxu0 0.0
    %1741 = vmatprep.subr.mxu0 0.0
    %1742 = vmatpush1.msra.mxu0 0.0
    %1743 = vmatprep.subr.mxu0 0.0
    %1744 = vmatpush1.msra.mxu0 0.0
    %1745 = vmatprep.subr.mxu0 0.0
    %1746 = vmatpush1.msra.mxu0 0.0
    %1747 = vmatprep.subr.mxu0 0.0
    %1748 = vmatpush1.msra.mxu0 0.0
    %1749 = vmatprep.subr.mxu0 0.0
    %1750 = vmatpush1.msra.mxu0 0.0
    %1751 = vmatprep.subr.mxu0 0.0
    %1752 = vmatpush1.msra.mxu0 0.0
    %1753 = vmatprep.subr.mxu0 0.0
    %1754 = vmatpush1.msra.mxu0 0.0
    %1755 = vmatprep.subr.mxu0 0.0
    %1756 = vmatpush1.msra.mxu0 0.0
    %1757 = vmatprep.subr.mxu0 0.0
    %1758 = vmatpush1.msra.mxu0 0.0
    %1759 = vmatprep.subr.mxu0 0.0
    %1760 = vmatpush1.msra.mxu0 0.0
    %1761 = vmatprep.subr.mxu0 0.0
    %1762 = vmatpush1.msra.mxu0 0.0
    %1763 = vmatprep.subr.mxu0 0.0
    %1764 = vmatpush1.msra.mxu0 0.0
    %1765 = vmatprep.subr.mxu0 0.0
    %1766 = vmatpush1.msra.mxu0 0.0
    %1767 = vmatprep.subr.mxu0 0.0
    %1768 = vmatpush1.msra.mxu0 0.0
    %1769 = vmatprep.subr.mxu0 0.0
    %1770 = vmatpush1.msra.mxu0 0.0
    %1771 = vmatprep.subr.mxu0 0.0
    %1772 = vmatpush1.msra.mxu0 0.0
    %1773 = vmatprep.subr.mxu0 0.0
    %1774 = vmatpush1.msra.mxu0 0.0
    %1775 = vmatprep.subr.mxu0 0.0
    %1776 = vmatpush1.msra.mxu0 0.0
    %1777 = vmatprep.subr.mxu0 0.0
    %1778 = vmatpush1.msra.mxu0 0.0
    %1779 = vmatprep.subr.mxu0 0.0
    %1780 = vmatpush1.msra.mxu0 0.0
    %1781 = vmatprep.subr.mxu0 0.0
    %1782 = vmatpush1.msra.mxu0 0.0
    %1783 = vmatprep.subr.mxu0 0.0
    %1784 = vmatpush1.msra.mxu0 0.0
    %1785 = vmatprep.subr.mxu0 0.0
    %1786 = vmatpush1.msra.mxu0 0.0
    %1787 = vmatprep.subr.mxu0 0.0
    %1788 = vmatpush1.msra.mxu0 0.0
    %1789 = vmatprep.subr.mxu0 0.0
    %1790 = vmatpush1.msra.mxu0 0.0
    %1791 = vmatprep.subr.mxu0 0.0
    %1792 = vmatpush1.msra.mxu0 0.0
    %1793 = vmatprep.subr.mxu0 0.0
    %1794 = vmatpush1.msra.mxu0 0.0
    %1795 = vmatprep.subr.mxu0 0.0
    %1796 = vmatpush1.msra.mxu0 0.0
    %1797 = vmatprep.subr.mxu0 0.0
    %1798 = vmatpush1.msra.mxu0 0.0
    %1799 = vmatprep.subr.mxu0 0.0
    %1800 = vmatpush1.msra.mxu0 0.0
    %1801 = vmatprep.mubr.f32.mxu0 0.0
    %1802 = vmatmul.mubr.f32.gmra.mrb[0].mxu0 %v1735
    %v1803 = vpop.f32.mrb[0].mxu0
    %v1804 = vadd.f32 %v1732, %v1803
    %v1805 = vpop.f32.mrb[0].mxu0
    %1806 = vdwg.mxu0
    %v1807 = vmax.f32 %v1804, 0.0
    %v1808 = vmin.f32 %v1804, 0.0
    %v1809 = vmul.f32 %v1808, 0.1
    %v1810 = vadd.f32 %v1807, %v1809
    %vm1811 = vcmask 7168
    %1812 = vst.msk [vmem:[%s89] sm:$0xff] %vm1811, %v1810
    // Predicated region
    $region246: #{forward.1} parent=1 // pred_check
      _
    $region247: #{forward.1} parent=1 // pred_check_branch
      %1814 = sbr.rel (0) target = $region249
    $region248: #{forward.1} parent=1 // pred_region
      _
    $region249: #{forward.1} parent=1 // pred_fallthru
      _
    // Predicated region
    $region250: #{forward.1} parent=1 // pred_check
      _
    $region251: #{forward.1} parent=1 // pred_check_branch
      %1816 = sbr.rel (0) target = $region253
    $region252: #{forward.1} parent=1 // pred_region
      _
    $region253: #{forward.1} parent=1 // pred_fallthru
      _
    %1817 = vsyncpa [#allocation4], 1
    %1818 = vsyncpa [#allocation6], 1
    %1819 = vsyncpa [#allocation9], 1
    %1820 = vsyncpa [#allocation12], 1
    %1821 = vsyncpa [#allocation15], 1
    %1822 = vsyncpa [#allocation18], 1
    %1823 = vsyncpa [#allocation21], 1
    %1824 = vsyncpa [#allocation24], 1
    %1825 = vsyncpa [#allocation27], 1

</llo_original>
